<compile_context>
chip_gen: v7x
topology: tpu7x:2x2x1
jax: 0.10.0
libtpu: 0.0.40
codegen_flags: <defaults>
</compile_context>

<pallas_src>
import functools

import jax
import jax.numpy as jnp
from jax.experimental import pallas as pl
from jax.experimental.pallas import tpu as pltpu

EPS = 1e-5
K = 784        # input features
H = 256        # hidden width
N_OUT = 128    # lane-padded output width (real logits are lanes [0:10])


def _round_up(x, m):
    return (x + m - 1) // m * m


def _mlp_kernel(x_ref, w1_ref, w2_ref, w3_ref, vec_ref, o_ref,
                h1_scr, h2_scr, stat_scr, *, true_batch):
    """Grid = (pass, batch_tile).

    stat_scr rows: 0 sum1, 1 sumsq1, 2 scale1, 3 shift1,
                   4 sum2, 5 sumsq2, 6 scale2, 7 shift2
    vec_ref rows:  0 gamma1, 1 beta1, 2 gamma2, 3 beta2, 4 b3 (lanes [0:128])
    """
    p = pl.program_id(0)          # pass index (0..2)
    t = pl.program_id(1)          # batch-tile index
    nt = pl.num_programs(1)
    tm = x_ref.shape[0]

    # Validity mask for rows of the zero-padded final batch tile: padded rows
    # must not contaminate the batch statistics.
    row_ids = t * tm + jax.lax.broadcasted_iota(jnp.int32, (tm, 1), 0)
    row_mask = (row_ids < true_batch).astype(jnp.float32)
    inv_b = 1.0 / float(true_batch)

    def accumulate(h, sum_row, sumsq_row):
        hm = h * row_mask
        stat_scr[sum_row:sum_row + 1, :] += jnp.sum(hm, axis=0, keepdims=True)
        stat_scr[sumsq_row:sumsq_row + 1, :] += jnp.sum(
            hm * hm, axis=0, keepdims=True)

    def finalize(sum_row, sumsq_row, gamma, beta, scale_row, shift_row):
        # Training-mode BN folded into one FMA:
        #   var   = E[h^2] - E[h]^2            (biased)
        #   scale = gamma * rsqrt(var + eps)
        #   shift = beta  - mean * scale
        # TODO(synk): switch to a shifted two-pass variance if activations stop
        # being near zero-mean (catastrophic cancellation risk of E[h^2]-E[h]^2).
        mean = stat_scr[sum_row:sum_row + 1, :] * inv_b
        var = jnp.maximum(
            stat_scr[sumsq_row:sumsq_row + 1, :] * inv_b - mean * mean, 0.0)
        scale = gamma * jax.lax.rsqrt(var + EPS)
        stat_scr[scale_row:scale_row + 1, :] = scale
        stat_scr[shift_row:shift_row + 1, :] = beta - mean * scale

    # ---------------- pass 0: fc1 + BN1 statistics ----------------
    @pl.when(p == 0)
    def _pass0():
        @pl.when(t == 0)
        def _():
            stat_scr[0:2, :] = jnp.zeros((2, H), jnp.float32)

        # fc1 bias omitted: cancelled exactly by the BN mean subtraction.
        h1 = jnp.dot(x_ref[...], w1_ref[...],
                     preferred_element_type=jnp.float32)
        h1_b16 = h1.astype(jnp.bfloat16)
        h1_scr[t] = h1_b16                      # stage for pass 1 (bf16)
        accumulate(h1_b16.astype(jnp.float32), 0, 1)

        @pl.when(t == nt - 1)
        def _():
            finalize(0, 1, vec_ref[0:1, :], vec_ref[1:2, :], 2, 3)

    # -------- pass 1: BN1 apply + ReLU + fc2 + BN2 statistics --------
    @pl.when(p == 1)
    def _pass1():
        @pl.when(t == 0)
        def _():
            stat_scr[4:6, :] = jnp.zeros((2, H), jnp.float32)

        scale1 = stat_scr[2:3, :]
        shift1 = stat_scr[3:4, :]
        a1 = jnp.maximum(h1_scr[t].astype(jnp.float32) * scale1 + shift1, 0.0)
        h2 = jnp.dot(a1.astype(jnp.bfloat16), w2_ref[...],
                     preferred_element_type=jnp.float32)
        h2_b16 = h2.astype(jnp.bfloat16)
        h2_scr[t] = h2_b16                      # stage for pass 2 (bf16)
        accumulate(h2_b16.astype(jnp.float32), 4, 5)

        @pl.when(t == nt - 1)
        def _():
            finalize(4, 5, vec_ref[2:3, :], vec_ref[3:4, :], 6, 7)

    # ---------------- pass 2: BN2 apply + ReLU + out ----------------
    @pl.when(p == 2)
    def _pass2():
        scale2 = stat_scr[6:7, :]
        shift2 = stat_scr[7:8, :]
        a2 = jnp.maximum(h2_scr[t].astype(jnp.float32) * scale2 + shift2, 0.0)
        b3 = vec_ref[4:5, 0:N_OUT]
        o_ref[...] = (jnp.dot(a2.astype(jnp.bfloat16), w3_ref[...],
                              preferred_element_type=jnp.float32)
                      + b3).astype(o_ref.dtype)


def mlp_forward(x, params, *, tm=512):
    """x: [B, 784] float32. Returns [B, 10] float32 logits.

    BatchNorm1d is evaluated in training mode (batch statistics, biased
    variance, eps=1e-5), matching MLP.forward() right after construction.
    """
    B = x.shape[0]
    assert x.shape[1] == K
    tm = min(_round_up(tm, 8), _round_up(B, 8))
    nt = pl.cdiv(B, tm)
    b_pad = nt * tm

    # Single fused cast + row-pad on the host side; the kernel streams bf16.
    x_b16 = jnp.pad(x.astype(jnp.bfloat16), ((0, b_pad - B), (0, 0)))

    # Explicit VMEM budget, sized for v7x (64 MiB physical, 32 MiB scoped default).
    weight_bytes = 2 * 2 * (K * H + H * H + H * N_OUT)          # bf16, 2 bufs each
    stream_bytes = 2 * (tm * K * 2 + tm * N_OUT * 4 + 8 * H * 4)
    stage_bytes = 2 * b_pad * H * 2                              # bf16 h1 + h2
    vmem_limit = min(64 << 20,
                     max(16 << 20,
                         2 * (weight_bytes + stream_bytes + stage_bytes)))
    # TODO(synk): for very large B the bf16 h1/h2 staging outgrows VMEM; spill the
    # staging buffers to HBM (memory_space=pl.ANY + manual make_async_copy).

    grid_spec = pltpu.PrefetchScalarGridSpec(
        num_scalar_prefetch=0,
        grid=(3, nt),                       # (pass, batch tile)
        in_specs=[
            # x is only consumed in pass 0; park on block 0 afterwards so it is
            # not re-streamed on passes 1/2.
            pl.BlockSpec((tm, K), lambda p, t: (jnp.where(p == 0, t, 0), 0)),
            # Weights / packed vectors: constant index maps -> DMA'd once and
            # VMEM-resident for the whole grid.
            pl.BlockSpec((K, H), lambda p, t: (0, 0)),
            pl.BlockSpec((H, H), lambda p, t: (0, 0)),
            pl.BlockSpec((H, N_OUT), lambda p, t: (0, 0)),
            pl.BlockSpec((8, H), lambda p, t: (0, 0)),
        ],
        # Output is only produced in pass 2; park on block 0 before that.
        out_specs=pl.BlockSpec((tm, N_OUT),
                               lambda p, t: (jnp.where(p == 2, t, 0), 0)),
        scratch_shapes=[
            pltpu.VMEM((nt, tm, H), jnp.bfloat16),   # staged h1
            pltpu.VMEM((nt, tm, H), jnp.bfloat16),   # staged h2
            pltpu.VMEM((8, H), jnp.float32),         # BN sums / scales / shifts
        ],
    )

    out_pad = pl.pallas_call(
        functools.partial(_mlp_kernel, true_batch=B),
        out_shape=jax.ShapeDtypeStruct((b_pad, N_OUT), jnp.float32),
        grid_spec=grid_spec,
        compiler_params=pltpu.CompilerParams(
            # Both grid axes carry state (BN accumulators / staged activations),
            # so keep them sequential.
            # TODO(synk): on v7x, shard the tile axis across the 2 TensorCores
            # and combine BN partial sums via CMEM/VMEM_SHARED + core_barrier.
            dimension_semantics=("arbitrary", "arbitrary"),
            vmem_limit_bytes=int(vmem_limit),
        ),
    )(x_b16, params["w1"], params["w2"], params["w3"], params["vecs"])

    return out_pad[:B, :10]


def init_params(key):
    """weight_init='normal' (std-normal), bias_init='const' (0), BN gamma=1 beta=0."""
    k1, k2, k3 = jax.random.split(key, 3)
    # PyTorch stores Linear weight as [out, in]; we keep [in, out] (pre-transposed).
    w1 = jax.random.normal(k1, (K, H), jnp.float32)
    w2 = jax.random.normal(k2, (H, H), jnp.float32)
    w3 = jax.random.normal(k3, (H, 10), jnp.float32)

    # bf16 weights: native bf16 MXU path with f32 accumulation inside the kernel.
    w1_b = w1.astype(jnp.bfloat16)
    w2_b = w2.astype(jnp.bfloat16)
    w3_b = jnp.zeros((H, N_OUT), jnp.bfloat16).at[:, :10].set(w3.astype(jnp.bfloat16))

    # Packed per-feature vectors ([8, 256] f32, one resident DMA):
    #   row 0 gamma1, row 1 beta1, row 2 gamma2, row 3 beta2,
    #   row 4 lanes [0:128] = lane-padded output bias b3 (zero: bias_init='const').
    # fc1/fc2 biases are omitted: they are cancelled exactly by training-mode BN.
    vecs = jnp.zeros((8, H), jnp.float32)
    vecs = vecs.at[0, :].set(1.0)   # gamma1
    vecs = vecs.at[2, :].set(1.0)   # gamma2

    return {"w1": w1_b, "w2": w2_b, "w3": w3_b, "vecs": vecs}


def _reference(x, p):
    """Pure-JAX mirror of the kernel numerics (bf16 matmuls/staging, f32 BN)."""
    vec = p["vecs"]
    g1, be1 = vec[0:1, :], vec[1:2, :]
    g2, be2 = vec[2:3, :], vec[3:4, :]
    b3 = vec[4:5, :N_OUT]

    def bn_relu(h_b16, g, be):
        h = h_b16.astype(jnp.float32)
        m = jnp.mean(h, axis=0, keepdims=True)
        v = jnp.maximum(jnp.mean(h * h, axis=0, keepdims=True) - m * m, 0.0)
        scale = g * jax.lax.rsqrt(v + EPS)
        shift = be - m * scale
        return jnp.maximum(h * scale + shift, 0.0)

    h1 = jnp.dot(x.astype(jnp.bfloat16), p["w1"],
                 preferred_element_type=jnp.float32)
    a1 = bn_relu(h1.astype(jnp.bfloat16), g1, be1)
    h2 = jnp.dot(a1.astype(jnp.bfloat16), p["w2"],
                 preferred_element_type=jnp.float32)
    a2 = bn_relu(h2.astype(jnp.bfloat16), g2, be2)
    out = jnp.dot(a2.astype(jnp.bfloat16), p["w3"],
                  preferred_element_type=jnp.float32) + b3
    return out[:, :10]


if __name__ == "__main__":
    key = jax.random.PRNGKey(0)
    kx, kp = jax.random.split(key)

    # Small deterministic test: B=200 with TM=64 exercises a 4-tile batch grid
    # plus the masked/padded final tile (BatchNorm1d training mode needs B > 1).
    B = 200
    x = jax.random.normal(kx, (B, K), jnp.float32)
    params = init_params(kp)

    out = jax.block_until_ready(mlp_forward(x, params, tm=64))
    ref = _reference(x, params)

    assert out.shape == (B, 10)
    assert jnp.allclose(out, ref, rtol=1e-2, atol=1e-2), (
        f"mismatch vs reference, max abs err = {jnp.max(jnp.abs(out - ref))}")
    print("KERNEL_OK")
</pallas_src>

<mosaic_0001>
module attributes {stable_mosaic.version = 11 : i64} {
  func.func @_mlp_kernel(%arg0: i32, %arg1: i32, %arg2: memref<64x784xbf16, #tpu.memory_space<vmem>>, %arg3: memref<784x256xbf16, #tpu.memory_space<vmem>>, %arg4: memref<256x256xbf16, #tpu.memory_space<vmem>>, %arg5: memref<256x128xbf16, #tpu.memory_space<vmem>>, %arg6: memref<8x256xf32, #tpu.memory_space<vmem>>, %arg7: memref<64x128xf32, #tpu.memory_space<vmem>>, %arg8: memref<4x64x256xbf16, #tpu.memory_space<vmem>>, %arg9: memref<4x64x256xbf16, #tpu.memory_space<vmem>>, %arg10: memref<8x256xf32, #tpu.memory_space<vmem>>) attributes {dimension_semantics = [#tpu.dimension_semantics<arbitrary>, #tpu.dimension_semantics<arbitrary>], iteration_bounds = array<i64: 3, 4>, scalar_prefetch = 0 : i64, scratch_operands = 3 : i64, tpu.core_type = #tpu.core_type<tc>, window_params = [{transform_indices = @transform_0, window_bounds = array<i64: 64, 784>}, {pipeline_mode = #tpu.pipeline_mode<synchronous>, transform_indices = @transform_1, window_bounds = array<i64: 784, 256>}, {pipeline_mode = #tpu.pipeline_mode<synchronous>, transform_indices = @transform_2, window_bounds = array<i64: 256, 256>}, {pipeline_mode = #tpu.pipeline_mode<synchronous>, transform_indices = @transform_3, window_bounds = array<i64: 256, 128>}, {pipeline_mode = #tpu.pipeline_mode<synchronous>, transform_indices = @transform_4, window_bounds = array<i64: 8, 256>}, {transform_indices = @transform_5, window_bounds = array<i64: 64, 128>}]} {
    %c64_i32 = arith.constant 64 : i32
    %0 = arith.muli %arg1, %c64_i32 : i32
    %1 = tpu.iota {dimensions = array<i32: 0>} : vector<64x1xi32>
    %2 = vector.broadcast %0 : i32 to vector<64x1xi32>
    %3 = arith.addi %2, %1 : vector<64x1xi32>
    %c200_i32 = arith.constant 200 : i32
    %4 = vector.broadcast %c200_i32 : i32 to vector<64x1xi32>
    %5 = arith.cmpi slt, %3, %4 : vector<64x1xi32>
    %6 = arith.extui %5 : vector<64x1xi1> to vector<64x1xi32>
    %7 = arith.sitofp %6 : vector<64x1xi32> to vector<64x1xf32>
    %c0_i32 = arith.constant 0 : i32
    %8 = arith.cmpi eq, %arg0, %c0_i32 : i32
    %9 = arith.extui %8 : i1 to i32
    %c0_i32_0 = arith.constant 0 : i32
    %10 = arith.cmpi ne, %9, %c0_i32_0 : i32
    scf.if %10 {
      %c0_i32_3 = arith.constant 0 : i32
      %17 = arith.cmpi eq, %arg1, %c0_i32_3 : i32
      %18 = arith.extui %17 : i1 to i32
      %c0_i32_4 = arith.constant 0 : i32
      %19 = arith.cmpi ne, %18, %c0_i32_4 : i32
      scf.if %19 {
        %cst_20 = arith.constant 0.000000e+00 : f32
        %45 = vector.broadcast %cst_20 : f32 to vector<2x256xf32>
        %c0_21 = arith.constant 0 : index
        %c0_22 = arith.constant 0 : index
        %46 = vector.load %arg10[%c0_21, %c0_22] : memref<8x256xf32, #tpu.memory_space<vmem>>, vector<2x256xf32>
        tpu.vector_store %arg10[%c0_21, %c0_22], %45 {strides = array<i32>} : memref<8x256xf32, #tpu.memory_space<vmem>>, vector<2x256xf32>,
      } else {
      }
      %c0 = arith.constant 0 : index
      %c0_5 = arith.constant 0 : index
      %20 = vector.load %arg2[%c0, %c0_5] : memref<64x784xbf16, #tpu.memory_space<vmem>>, vector<64x784xbf16>
      %c0_6 = arith.constant 0 : index
      %c0_7 = arith.constant 0 : index
      %21 = vector.load %arg3[%c0_6, %c0_7] : memref<784x256xbf16, #tpu.memory_space<vmem>>, vector<784x256xbf16>
      %cst = arith.constant dense<0.000000e+00> : vector<64x256xf32>
      %22 = tpu.matmul %20, %21, %cst {dimension_numbers = #tpu.dot_dimension_numbers<[1], [0], [0], [1], [0, 0, 1, 1], [], []>} : vector<64x784xbf16>, vector<784x256xbf16>, vector<64x256xf32> -> vector<64x256xf32>
      %23 = arith.truncf %22 : vector<64x256xf32> to vector<64x256xbf16>
      %24 = arith.index_cast %arg1 : i32 to index
      %c0_8 = arith.constant 0 : index
      %c0_9 = arith.constant 0 : index
      %25 = vector.load %arg8[%24, %c0_8, %c0_9] : memref<4x64x256xbf16, #tpu.memory_space<vmem>>, vector<1x64x256xbf16>
      %26 = vector.shape_cast %25 : vector<1x64x256xbf16> to vector<64x256xbf16>
      %27 = vector.shape_cast %23 : vector<64x256xbf16> to vector<1x64x256xbf16>
      tpu.vector_store %arg8[%24, %c0_8, %c0_9], %27 {strides = array<i32>} : memref<4x64x256xbf16, #tpu.memory_space<vmem>>, vector<1x64x256xbf16>,
      %28 = arith.extf %23 : vector<64x256xbf16> to vector<64x256xf32>
      %29 = vector.broadcast %7 : vector<64x1xf32> to vector<64x256xf32>
      %30 = arith.mulf %28, %29 : vector<64x256xf32>
      %c0_10 = arith.constant 0 : index
      %c0_11 = arith.constant 0 : index
      %31 = vector.load %arg10[%c0_10, %c0_11] : memref<8x256xf32, #tpu.memory_space<vmem>>, vector<1x256xf32>
      %cst_12 = arith.constant dense<0.000000e+00> : vector<256xf32>
      %32 = vector.multi_reduction <add>, %30, %cst_12 [0] : vector<64x256xf32> to vector<256xf32>
      %33 = vector.shape_cast %32 : vector<256xf32> to vector<1x256xf32>
      %34 = arith.addf %31, %33 : vector<1x256xf32>
      %c0_13 = arith.constant 0 : index
      %c0_14 = arith.constant 0 : index
      %35 = vector.load %arg10[%c0_13, %c0_14] : memref<8x256xf32, #tpu.memory_space<vmem>>, vector<1x256xf32>
      tpu.vector_store %arg10[%c0_13, %c0_14], %34 {strides = array<i32>} : memref<8x256xf32, #tpu.memory_space<vmem>>, vector<1x256xf32>,
      %c1 = arith.constant 1 : index
      %c0_15 = arith.constant 0 : index
      %36 = vector.load %arg10[%c1, %c0_15] : memref<8x256xf32, #tpu.memory_space<vmem>>, vector<1x256xf32>
      %37 = arith.mulf %30, %30 : vector<64x256xf32>
      %cst_16 = arith.constant dense<0.000000e+00> : vector<256xf32>
      %38 = vector.multi_reduction <add>, %37, %cst_16 [0] : vector<64x256xf32> to vector<256xf32>
      %39 = vector.shape_cast %38 : vector<256xf32> to vector<1x256xf32>
      %40 = arith.addf %36, %39 : vector<1x256xf32>
      %c1_17 = arith.constant 1 : index
      %c0_18 = arith.constant 0 : index
      %41 = vector.load %arg10[%c1_17, %c0_18] : memref<8x256xf32, #tpu.memory_space<vmem>>, vector<1x256xf32>
      tpu.vector_store %arg10[%c1_17, %c0_18], %40 {strides = array<i32>} : memref<8x256xf32, #tpu.memory_space<vmem>>, vector<1x256xf32>,
      %c3_i32 = arith.constant 3 : i32
      %42 = arith.cmpi eq, %arg1, %c3_i32 : i32
      %43 = arith.extui %42 : i1 to i32
      %c0_i32_19 = arith.constant 0 : i32
      %44 = arith.cmpi ne, %43, %c0_i32_19 : i32
      scf.if %44 {
        %c0_20 = arith.constant 0 : index
        %c0_21 = arith.constant 0 : index
        %45 = vector.load %arg6[%c0_20, %c0_21] : memref<8x256xf32, #tpu.memory_space<vmem>>, vector<1x256xf32>
        %c1_22 = arith.constant 1 : index
        %c0_23 = arith.constant 0 : index
        %46 = vector.load %arg6[%c1_22, %c0_23] : memref<8x256xf32, #tpu.memory_space<vmem>>, vector<1x256xf32>
        %c0_24 = arith.constant 0 : index
        %c0_25 = arith.constant 0 : index
        %47 = vector.load %arg10[%c0_24, %c0_25] : memref<8x256xf32, #tpu.memory_space<vmem>>, vector<1x256xf32>
        %cst_26 = arith.constant 5.000000e-03 : f32
        %48 = vector.broadcast %cst_26 : f32 to vector<1x256xf32>
        %49 = arith.mulf %47, %48 : vector<1x256xf32>
        %c1_27 = arith.constant 1 : index
        %c0_28 = arith.constant 0 : index
        %50 = vector.load %arg10[%c1_27, %c0_28] : memref<8x256xf32, #tpu.memory_space<vmem>>, vector<1x256xf32>
        %cst_29 = arith.constant 5.000000e-03 : f32
        %51 = vector.broadcast %cst_29 : f32 to vector<1x256xf32>
        %52 = arith.mulf %50, %51 : vector<1x256xf32>
        %53 = arith.mulf %49, %49 : vector<1x256xf32>
        %54 = arith.subf %52, %53 : vector<1x256xf32>
        %cst_30 = arith.constant 0.000000e+00 : f32
        %55 = vector.broadcast %cst_30 : f32 to vector<1x256xf32>
        %56 = arith.maximumf %54, %55 : vector<1x256xf32>
        %cst_31 = arith.constant 9.99999974E-6 : f32
        %57 = vector.broadcast %cst_31 : f32 to vector<1x256xf32>
        %58 = arith.addf %56, %57 : vector<1x256xf32>
        %59 = math.rsqrt %58 : vector<1x256xf32>
        %60 = arith.mulf %45, %59 : vector<1x256xf32>
        %c2 = arith.constant 2 : index
        %c0_32 = arith.constant 0 : index
        %61 = vector.load %arg10[%c2, %c0_32] : memref<8x256xf32, #tpu.memory_space<vmem>>, vector<1x256xf32>
        tpu.vector_store %arg10[%c2, %c0_32], %60 {strides = array<i32>} : memref<8x256xf32, #tpu.memory_space<vmem>>, vector<1x256xf32>,
        %62 = arith.mulf %49, %60 : vector<1x256xf32>
        %63 = arith.subf %46, %62 : vector<1x256xf32>
        %c3 = arith.constant 3 : index
        %c0_33 = arith.constant 0 : index
        %64 = vector.load %arg10[%c3, %c0_33] : memref<8x256xf32, #tpu.memory_space<vmem>>, vector<1x256xf32>
        tpu.vector_store %arg10[%c3, %c0_33], %63 {strides = array<i32>} : memref<8x256xf32, #tpu.memory_space<vmem>>, vector<1x256xf32>,
      } else {
      }
    } else {
    }
    %c1_i32 = arith.constant 1 : i32
    %11 = arith.cmpi eq, %arg0, %c1_i32 : i32
    %12 = arith.extui %11 : i1 to i32
    %c0_i32_1 = arith.constant 0 : i32
    %13 = arith.cmpi ne, %12, %c0_i32_1 : i32
    scf.if %13 {
      %c0_i32_3 = arith.constant 0 : i32
      %17 = arith.cmpi eq, %arg1, %c0_i32_3 : i32
      %18 = arith.extui %17 : i1 to i32
      %c0_i32_4 = arith.constant 0 : i32
      %19 = arith.cmpi ne, %18, %c0_i32_4 : i32
      scf.if %19 {
        %cst_22 = arith.constant 0.000000e+00 : f32
        %57 = vector.broadcast %cst_22 : f32 to vector<2x256xf32>
        %c4_23 = arith.constant 4 : index
        %c0_24 = arith.constant 0 : index
        %58 = vector.load %arg10[%c4_23, %c0_24] : memref<8x256xf32, #tpu.memory_space<vmem>>, vector<2x256xf32>
        tpu.vector_store %arg10[%c4_23, %c0_24], %57 {strides = array<i32>} : memref<8x256xf32, #tpu.memory_space<vmem>>, vector<2x256xf32>,
      } else {
      }
      %c2 = arith.constant 2 : index
      %c0 = arith.constant 0 : index
      %20 = vector.load %arg10[%c2, %c0] : memref<8x256xf32, #tpu.memory_space<vmem>>, vector<1x256xf32>
      %c3 = arith.constant 3 : index
      %c0_5 = arith.constant 0 : index
      %21 = vector.load %arg10[%c3, %c0_5] : memref<8x256xf32, #tpu.memory_space<vmem>>, vector<1x256xf32>
      %22 = arith.index_cast %arg1 : i32 to index
      %c0_6 = arith.constant 0 : index
      %c0_7 = arith.constant 0 : index
      %23 = vector.load %arg8[%22, %c0_6, %c0_7] : memref<4x64x256xbf16, #tpu.memory_space<vmem>>, vector<1x64x256xbf16>
      %24 = vector.shape_cast %23 : vector<1x64x256xbf16> to vector<64x256xbf16>
      %25 = arith.extf %24 : vector<64x256xbf16> to vector<64x256xf32>
      %26 = vector.broadcast %20 : vector<1x256xf32> to vector<64x256xf32>
      %27 = arith.mulf %25, %26 : vector<64x256xf32>
      %28 = vector.broadcast %21 : vector<1x256xf32> to vector<64x256xf32>
      %29 = arith.addf %27, %28 : vector<64x256xf32>
      %cst = arith.constant 0.000000e+00 : f32
      %30 = vector.broadcast %cst : f32 to vector<64x256xf32>
      %31 = arith.maximumf %29, %30 : vector<64x256xf32>
      %32 = arith.truncf %31 : vector<64x256xf32> to vector<64x256xbf16>
      %c0_8 = arith.constant 0 : index
      %c0_9 = arith.constant 0 : index
      %33 = vector.load %arg4[%c0_8, %c0_9] : memref<256x256xbf16, #tpu.memory_space<vmem>>, vector<256x256xbf16>
      %cst_10 = arith.constant dense<0.000000e+00> : vector<64x256xf32>
      %34 = tpu.matmul %32, %33, %cst_10 {dimension_numbers = #tpu.dot_dimension_numbers<[1], [0], [0], [1], [0, 0, 1, 1], [], []>} : vector<64x256xbf16>, vector<256x256xbf16>, vector<64x256xf32> -> vector<64x256xf32>
      %35 = arith.truncf %34 : vector<64x256xf32> to vector<64x256xbf16>
      %36 = arith.index_cast %arg1 : i32 to index
      %c0_11 = arith.constant 0 : index
      %c0_12 = arith.constant 0 : index
      %37 = vector.load %arg9[%36, %c0_11, %c0_12] : memref<4x64x256xbf16, #tpu.memory_space<vmem>>, vector<1x64x256xbf16>
      %38 = vector.shape_cast %37 : vector<1x64x256xbf16> to vector<64x256xbf16>
      %39 = vector.shape_cast %35 : vector<64x256xbf16> to vector<1x64x256xbf16>
      tpu.vector_store %arg9[%36, %c0_11, %c0_12], %39 {strides = array<i32>} : memref<4x64x256xbf16, #tpu.memory_space<vmem>>, vector<1x64x256xbf16>,
      %40 = arith.extf %35 : vector<64x256xbf16> to vector<64x256xf32>
      %41 = vector.broadcast %7 : vector<64x1xf32> to vector<64x256xf32>
      %42 = arith.mulf %40, %41 : vector<64x256xf32>
      %c4 = arith.constant 4 : index
      %c0_13 = arith.constant 0 : index
      %43 = vector.load %arg10[%c4, %c0_13] : memref<8x256xf32, #tpu.memory_space<vmem>>, vector<1x256xf32>
      %cst_14 = arith.constant dense<0.000000e+00> : vector<256xf32>
      %44 = vector.multi_reduction <add>, %42, %cst_14 [0] : vector<64x256xf32> to vector<256xf32>
      %45 = vector.shape_cast %44 : vector<256xf32> to vector<1x256xf32>
      %46 = arith.addf %43, %45 : vector<1x256xf32>
      %c4_15 = arith.constant 4 : index
      %c0_16 = arith.constant 0 : index
      %47 = vector.load %arg10[%c4_15, %c0_16] : memref<8x256xf32, #tpu.memory_space<vmem>>, vector<1x256xf32>
      tpu.vector_store %arg10[%c4_15, %c0_16], %46 {strides = array<i32>} : memref<8x256xf32, #tpu.memory_space<vmem>>, vector<1x256xf32>,
      %c5 = arith.constant 5 : index
      %c0_17 = arith.constant 0 : index
      %48 = vector.load %arg10[%c5, %c0_17] : memref<8x256xf32, #tpu.memory_space<vmem>>, vector<1x256xf32>
      %49 = arith.mulf %42, %42 : vector<64x256xf32>
      %cst_18 = arith.constant dense<0.000000e+00> : vector<256xf32>
      %50 = vector.multi_reduction <add>, %49, %cst_18 [0] : vector<64x256xf32> to vector<256xf32>
      %51 = vector.shape_cast %50 : vector<256xf32> to vector<1x256xf32>
      %52 = arith.addf %48, %51 : vector<1x256xf32>
      %c5_19 = arith.constant 5 : index
      %c0_20 = arith.constant 0 : index
      %53 = vector.load %arg10[%c5_19, %c0_20] : memref<8x256xf32, #tpu.memory_space<vmem>>, vector<1x256xf32>
      tpu.vector_store %arg10[%c5_19, %c0_20], %52 {strides = array<i32>} : memref<8x256xf32, #tpu.memory_space<vmem>>, vector<1x256xf32>,
      %c3_i32 = arith.constant 3 : i32
      %54 = arith.cmpi eq, %arg1, %c3_i32 : i32
      %55 = arith.extui %54 : i1 to i32
      %c0_i32_21 = arith.constant 0 : i32
      %56 = arith.cmpi ne, %55, %c0_i32_21 : i32
      scf.if %56 {
        %c2_22 = arith.constant 2 : index
        %c0_23 = arith.constant 0 : index
        %57 = vector.load %arg6[%c2_22, %c0_23] : memref<8x256xf32, #tpu.memory_space<vmem>>, vector<1x256xf32>
        %c3_24 = arith.constant 3 : index
        %c0_25 = arith.constant 0 : index
        %58 = vector.load %arg6[%c3_24, %c0_25] : memref<8x256xf32, #tpu.memory_space<vmem>>, vector<1x256xf32>
        %c4_26 = arith.constant 4 : index
        %c0_27 = arith.constant 0 : index
        %59 = vector.load %arg10[%c4_26, %c0_27] : memref<8x256xf32, #tpu.memory_space<vmem>>, vector<1x256xf32>
        %cst_28 = arith.constant 5.000000e-03 : f32
        %60 = vector.broadcast %cst_28 : f32 to vector<1x256xf32>
        %61 = arith.mulf %59, %60 : vector<1x256xf32>
        %c5_29 = arith.constant 5 : index
        %c0_30 = arith.constant 0 : index
        %62 = vector.load %arg10[%c5_29, %c0_30] : memref<8x256xf32, #tpu.memory_space<vmem>>, vector<1x256xf32>
        %cst_31 = arith.constant 5.000000e-03 : f32
        %63 = vector.broadcast %cst_31 : f32 to vector<1x256xf32>
        %64 = arith.mulf %62, %63 : vector<1x256xf32>
        %65 = arith.mulf %61, %61 : vector<1x256xf32>
        %66 = arith.subf %64, %65 : vector<1x256xf32>
        %cst_32 = arith.constant 0.000000e+00 : f32
        %67 = vector.broadcast %cst_32 : f32 to vector<1x256xf32>
        %68 = arith.maximumf %66, %67 : vector<1x256xf32>
        %cst_33 = arith.constant 9.99999974E-6 : f32
        %69 = vector.broadcast %cst_33 : f32 to vector<1x256xf32>
        %70 = arith.addf %68, %69 : vector<1x256xf32>
        %71 = math.rsqrt %70 : vector<1x256xf32>
        %72 = arith.mulf %57, %71 : vector<1x256xf32>
        %c6 = arith.constant 6 : index
        %c0_34 = arith.constant 0 : index
        %73 = vector.load %arg10[%c6, %c0_34] : memref<8x256xf32, #tpu.memory_space<vmem>>, vector<1x256xf32>
        tpu.vector_store %arg10[%c6, %c0_34], %72 {strides = array<i32>} : memref<8x256xf32, #tpu.memory_space<vmem>>, vector<1x256xf32>,
        %74 = arith.mulf %61, %72 : vector<1x256xf32>
        %75 = arith.subf %58, %74 : vector<1x256xf32>
        %c7 = arith.constant 7 : index
        %c0_35 = arith.constant 0 : index
        %76 = vector.load %arg10[%c7, %c0_35] : memref<8x256xf32, #tpu.memory_space<vmem>>, vector<1x256xf32>
        tpu.vector_store %arg10[%c7, %c0_35], %75 {strides = array<i32>} : memref<8x256xf32, #tpu.memory_space<vmem>>, vector<1x256xf32>,
      } else {
      }
    } else {
    }
    %c2_i32 = arith.constant 2 : i32
    %14 = arith.cmpi eq, %arg0, %c2_i32 : i32
    %15 = arith.extui %14 : i1 to i32
    %c0_i32_2 = arith.constant 0 : i32
    %16 = arith.cmpi ne, %15, %c0_i32_2 : i32
    scf.if %16 {
      %c6 = arith.constant 6 : index
      %c0 = arith.constant 0 : index
      %17 = vector.load %arg10[%c6, %c0] : memref<8x256xf32, #tpu.memory_space<vmem>>, vector<1x256xf32>
      %c7 = arith.constant 7 : index
      %c0_3 = arith.constant 0 : index
      %18 = vector.load %arg10[%c7, %c0_3] : memref<8x256xf32, #tpu.memory_space<vmem>>, vector<1x256xf32>
      %19 = arith.index_cast %arg1 : i32 to index
      %c0_4 = arith.constant 0 : index
      %c0_5 = arith.constant 0 : index
      %20 = vector.load %arg9[%19, %c0_4, %c0_5] : memref<4x64x256xbf16, #tpu.memory_space<vmem>>, vector<1x64x256xbf16>
      %21 = vector.shape_cast %20 : vector<1x64x256xbf16> to vector<64x256xbf16>
      %22 = arith.extf %21 : vector<64x256xbf16> to vector<64x256xf32>
      %23 = vector.broadcast %17 : vector<1x256xf32> to vector<64x256xf32>
      %24 = arith.mulf %22, %23 : vector<64x256xf32>
      %25 = vector.broadcast %18 : vector<1x256xf32> to vector<64x256xf32>
      %26 = arith.addf %24, %25 : vector<64x256xf32>
      %cst = arith.constant 0.000000e+00 : f32
      %27 = vector.broadcast %cst : f32 to vector<64x256xf32>
      %28 = arith.maximumf %26, %27 : vector<64x256xf32>
      %c4 = arith.constant 4 : index
      %c0_6 = arith.constant 0 : index
      %29 = vector.load %arg6[%c4, %c0_6] : memref<8x256xf32, #tpu.memory_space<vmem>>, vector<1x128xf32>
      %30 = arith.truncf %28 : vector<64x256xf32> to vector<64x256xbf16>
      %c0_7 = arith.constant 0 : index
      %c0_8 = arith.constant 0 : index
      %31 = vector.load %arg5[%c0_7, %c0_8] : memref<256x128xbf16, #tpu.memory_space<vmem>>, vector<256x128xbf16>
      %cst_9 = arith.constant dense<0.000000e+00> : vector<64x128xf32>
      %32 = tpu.matmul %30, %31, %cst_9 {dimension_numbers = #tpu.dot_dimension_numbers<[1], [0], [0], [1], [0, 0, 1, 1], [], []>} : vector<64x256xbf16>, vector<256x128xbf16>, vector<64x128xf32> -> vector<64x128xf32>
      %33 = vector.broadcast %29 : vector<1x128xf32> to vector<64x128xf32>
      %34 = arith.addf %32, %33 : vector<64x128xf32>
      %c0_10 = arith.constant 0 : index
      %c0_11 = arith.constant 0 : index
      %35 = vector.load %arg7[%c0_10, %c0_11] : memref<64x128xf32, #tpu.memory_space<vmem>>, vector<64x128xf32>
      tpu.vector_store %arg7[%c0_10, %c0_11], %34 {strides = array<i32>} : memref<64x128xf32, #tpu.memory_space<vmem>>, vector<64x128xf32>,
    } else {
    }
    return
  }
  func.func @transform_0(%arg0: i32, %arg1: i32) -> (i32, i32) {
    %c0_i32 = arith.constant 0 : i32
    %0 = arith.cmpi eq, %arg0, %c0_i32 : i32
    %c0_i32_0 = arith.constant 0 : i32
    %1 = arith.select %0, %arg1, %c0_i32_0 : i32
    %c0_i32_1 = arith.constant 0 : i32
    %c0_i32_2 = arith.constant 0 : i32
    return %1, %c0_i32_1 : i32, i32
  }
  func.func @transform_1(%arg0: i32, %arg1: i32) -> (i32, i32) {
    %c0_i32 = arith.constant 0 : i32
    %c0_i32_0 = arith.constant 0 : i32
    %c0_i32_1 = arith.constant 0 : i32
    return %c0_i32, %c0_i32_0 : i32, i32
  }
  func.func @transform_2(%arg0: i32, %arg1: i32) -> (i32, i32) {
    %c0_i32 = arith.constant 0 : i32
    %c0_i32_0 = arith.constant 0 : i32
    %c0_i32_1 = arith.constant 0 : i32
    return %c0_i32, %c0_i32_0 : i32, i32
  }
  func.func @transform_3(%arg0: i32, %arg1: i32) -> (i32, i32) {
    %c0_i32 = arith.constant 0 : i32
    %c0_i32_0 = arith.constant 0 : i32
    %c0_i32_1 = arith.constant 0 : i32
    return %c0_i32, %c0_i32_0 : i32, i32
  }
  func.func @transform_4(%arg0: i32, %arg1: i32) -> (i32, i32) {
    %c0_i32 = arith.constant 0 : i32
    %c0_i32_0 = arith.constant 0 : i32
    %c0_i32_1 = arith.constant 0 : i32
    return %c0_i32, %c0_i32_0 : i32, i32
  }
  func.func @transform_5(%arg0: i32, %arg1: i32) -> (i32, i32) {
    %c2_i32 = arith.constant 2 : i32
    %0 = arith.cmpi eq, %arg0, %c2_i32 : i32
    %c0_i32 = arith.constant 0 : i32
    %1 = arith.select %0, %arg1, %c0_i32 : i32
    %c0_i32_0 = arith.constant 0 : i32
    %c0_i32_1 = arith.constant 0 : i32
    return %1, %c0_i32_0 : i32, i32
  }
}

</mosaic_0001>

<llo_original>
// kernel: tpu_custom_call.1
$region0: #{tpu_custom_call.1}
  #allocation0 [shape = 'u32[]', space=smem, size = 0x4, offset = 0x4, fixed_abs, tag = 'smem constant byte address 0x4 - core index']
  #allocation1 [shape = 'u32[144,128]{1,0:T(1,128)}', space=vmem, size = 0x12000, scoped, tag = 'internal scratch']
  #allocation2 [shape = 'bf16[4,64,256]{2,1,0:T(16,128)(2,1)}', space=vmem, size = 0x20000, scoped, tag = 'scratch operand']
  #allocation3 [shape = 'bf16[4,64,256]{2,1,0:T(16,128)(2,1)}', space=vmem, size = 0x20000, scoped, tag = 'scratch operand']
  #allocation4 [shape = 'f32[8,256]{1,0:T(8,128)}', space=vmem, size = 0x2000, scoped, tag = 'scratch operand']
  %s0 = inlined_call_operand.vmem [shape: bf16[256,784], index: 0, kind: input, shape index: {}]
  %s1 = inlined_call_operand.vmem [shape: bf16[784,256], index: 1, kind: input, shape index: {}]
  %s2 = inlined_call_operand.vmem [shape: bf16[256,256], index: 2, kind: input, shape index: {}]
  %s3 = inlined_call_operand.vmem [shape: bf16[256,128], index: 3, kind: input, shape index: {}]
  %s4 = inlined_call_operand.vmem [shape: f32[8,256], index: 4, kind: input, shape index: {}]
  %s5 = inlined_call_operand.hbm [shape: f32[256,128], index: 5, kind: output, shape index: {}]
  %s6 = sld [smem:[#allocation0]]
  $region81: #{tpu_custom_call.1} parent=0
    _
  %s8 = ssub.s32 1, %s6
  %s9 = scalar_select 0, %s8, %s6
  $region1: #{tpu_custom_call.1} parent=0
    #allocation5 [shape = 'u8[65536]{0}', space=vmem, size = 0x10000, scoped, tag = 'output window, operand 0']
    #allocation6 [shape = 's32[2]{0}', space=sflag, size = 0x8, scoped, tag = 'scoped memory for tpu_custom_call.1']
    %10 = vsyncpa [#allocation6], 0
    %s11 = scalar_lea.sflag [#allocation6], 1
    %12 = vsyncpa %s11, 0
    loop: start=0, step=1, limit=14
    $region2: #{tpu_custom_call.1} parent=1 // loop_pre_header
      _
    $region3: #{tpu_custom_call.1} parent=1 // loop_header
      %s14 = sphi 0, %s18
      %p15 = scmp.ge.s32.totalorder %s14, 14
      %s21 = sphi 0, %s33
      %s22 = sphi 0, %s29
      %s23 = sphi 0, %s21
      %s24 = sphi 0, %s22
      %s25 = sphi 0, %s23
      %s26 = sphi 0, %s24
      %s40 = sphi 0, %s42
      %s43 = sphi 0, %s40
      %s44 = sphi 0, %s43
      %s60 = sphi 0, %s44
      %s64 = sphi 0, %s64
      %s66 = sphi 0, %s64
      %s67 = sphi 0, %s66
      %s81 = sphi 0, %s67
      %s85 = sphi 0, %s85
      %s87 = sphi 0, %s85
      %s88 = sphi 0, %s87
      %s102 = sphi 0, %s88
      %s106 = sphi 0, %s106
      %s108 = sphi 0, %s106
      %s109 = sphi 0, %s108
      %s123 = sphi 0, %s109
      %s127 = sphi 0, %s127
      %s129 = sphi 0, %s127
      %s130 = sphi 0, %s129
      %s144 = sphi 0, %s130
      %s154 = sphi 0, %s156
      %s157 = sphi 0, %s154
      %s158 = sphi 0, %s157
      %s174 = sphi 0, %s158
    $region4: #{tpu_custom_call.1} parent=1 // loop_header_branch
      %17 = sbr.rel (%p15) target = $region8
    $region5: #{tpu_custom_call.1} parent=1 // loop_body
      %s19 = ssub.s32 %s14, 1
      %s20 = ssub.s32 %s14, 2
      %s27 = sadd.s32 1, %s22
      %p28 = scmp.ge.s32.totalorder %s27, 4
      %s29 = scalar_select %p28, 0, %s27
      %s30 = sadd.s32 1, %s21
      %s31 = scalar_select %p28, %s30, %s21
      %p32 = scmp.ge.s32.totalorder %s31, 3
      %s33 = scalar_select %p32, 0, %s31
      %p34 = scmp.eq.s32.totalorder %s21, 0
      %s35 = scalar_select %p34, %s22, 0
      %p36 = scmp.eq.s32.totalorder %s33, 0
      %s37 = scalar_select %p36, %s29, 0
      %s38 = ssub.s32 %s35, %s37
      %p39 = scmp.eq.s32.totalorder %s38, 0
      %s41 = sadd.s32 %s40, 1
      %s42 = scalar_select %p39, %s40, %s41
      %p45 = pneg %p39
      %p46 = scmp.eq.s32.totalorder %s14, 11
      %p47 = por %p45, %p46
      %p48 = scmp.ne.s32.totalorder %s40, %s43
      %p49 = scmp.eq.s32.totalorder %s14, 0
      %p50 = por %p48, %p49
      %p51 = scmp.ne.s32.totalorder %s40, %s43
      %p52 = scmp.eq.s32.totalorder %s19, 11
      %p53 = por %p51, %p52
      %p54 = scmp.ne.s32.totalorder %s43, %s44
      %p55 = scmp.eq.s32.totalorder %s19, 0
      %p56 = por %p54, %p55
      %p57 = scmp.ne.s32.totalorder %s43, %s44
      %p58 = scmp.eq.s32.totalorder %s20, 11
      %p59 = por %p57, %p58
      %p61 = scmp.ne.s32.totalorder %s44, %s60
      %p62 = scmp.eq.s32.totalorder %s20, 0
      %p63 = por %p61, %p62
      %s65 = sadd.s32 %s64, 1
      %p68 = scmp.eq.s32.totalorder %s14, 11
      %p69 = scmp.ne.s32.totalorder %s64, %s66
      %p70 = scmp.eq.s32.totalorder %s14, 0
      %p71 = por %p69, %p70
      %p72 = scmp.ne.s32.totalorder %s64, %s66
      %p73 = scmp.eq.s32.totalorder %s19, 11
      %p74 = por %p72, %p73
      %p75 = scmp.ne.s32.totalorder %s66, %s67
      %p76 = scmp.eq.s32.totalorder %s19, 0
      %p77 = por %p75, %p76
      %p78 = scmp.ne.s32.totalorder %s66, %s67
      %p79 = scmp.eq.s32.totalorder %s20, 11
      %p80 = por %p78, %p79
      %p82 = scmp.ne.s32.totalorder %s67, %s81
      %p83 = scmp.eq.s32.totalorder %s20, 0
      %p84 = por %p82, %p83
      %s86 = sadd.s32 %s85, 1
      %p89 = scmp.eq.s32.totalorder %s14, 11
      %p90 = scmp.ne.s32.totalorder %s85, %s87
      %p91 = scmp.eq.s32.totalorder %s14, 0
      %p92 = por %p90, %p91
      %p93 = scmp.ne.s32.totalorder %s85, %s87
      %p94 = scmp.eq.s32.totalorder %s19, 11
      %p95 = por %p93, %p94
      %p96 = scmp.ne.s32.totalorder %s87, %s88
      %p97 = scmp.eq.s32.totalorder %s19, 0
      %p98 = por %p96, %p97
      %p99 = scmp.ne.s32.totalorder %s87, %s88
      %p100 = scmp.eq.s32.totalorder %s20, 11
      %p101 = por %p99, %p100
      %p103 = scmp.ne.s32.totalorder %s88, %s102
      %p104 = scmp.eq.s32.totalorder %s20, 0
      %p105 = por %p103, %p104
      %s107 = sadd.s32 %s106, 1
      %p110 = scmp.eq.s32.totalorder %s14, 11
      %p111 = scmp.ne.s32.totalorder %s106, %s108
      %p112 = scmp.eq.s32.totalorder %s14, 0
      %p113 = por %p111, %p112
      %p114 = scmp.ne.s32.totalorder %s106, %s108
      %p115 = scmp.eq.s32.totalorder %s19, 11
      %p116 = por %p114, %p115
      %p117 = scmp.ne.s32.totalorder %s108, %s109
      %p118 = scmp.eq.s32.totalorder %s19, 0
      %p119 = por %p117, %p118
      %p120 = scmp.ne.s32.totalorder %s108, %s109
      %p121 = scmp.eq.s32.totalorder %s20, 11
      %p122 = por %p120, %p121
      %p124 = scmp.ne.s32.totalorder %s109, %s123
      %p125 = scmp.eq.s32.totalorder %s20, 0
      %p126 = por %p124, %p125
      %s128 = sadd.s32 %s127, 1
      %p131 = scmp.eq.s32.totalorder %s14, 11
      %p132 = scmp.ne.s32.totalorder %s127, %s129
      %p133 = scmp.eq.s32.totalorder %s14, 0
      %p134 = por %p132, %p133
      %p135 = scmp.ne.s32.totalorder %s127, %s129
      %p136 = scmp.eq.s32.totalorder %s19, 11
      %p137 = por %p135, %p136
      %p138 = scmp.ne.s32.totalorder %s129, %s130
      %p139 = scmp.eq.s32.totalorder %s19, 0
      %p140 = por %p138, %p139
      %p141 = scmp.ne.s32.totalorder %s129, %s130
      %p142 = scmp.eq.s32.totalorder %s20, 11
      %p143 = por %p141, %p142
      %p145 = scmp.ne.s32.totalorder %s130, %s144
      %p146 = scmp.eq.s32.totalorder %s20, 0
      %p147 = por %p145, %p146
      %p148 = scmp.eq.s32.totalorder %s21, 2
      %s149 = scalar_select %p148, %s22, 0
      %p150 = scmp.eq.s32.totalorder %s33, 2
      %s151 = scalar_select %p150, %s29, 0
      %s152 = ssub.s32 %s149, %s151
      %p153 = scmp.eq.s32.totalorder %s152, 0
      %s155 = sadd.s32 %s154, 1
      %s156 = scalar_select %p153, %s154, %s155
      %p159 = pneg %p153
      %p160 = scmp.eq.s32.totalorder %s14, 11
      %p161 = por %p159, %p160
      %p162 = scmp.ne.s32.totalorder %s154, %s157
      %p163 = scmp.eq.s32.totalorder %s14, 0
      %p164 = por %p162, %p163
      %p165 = scmp.ne.s32.totalorder %s154, %s157
      %p166 = scmp.eq.s32.totalorder %s19, 11
      %p167 = por %p165, %p166
      %p168 = scmp.ne.s32.totalorder %s157, %s158
      %p169 = scmp.eq.s32.totalorder %s19, 0
      %p170 = por %p168, %p169
      %p171 = scmp.ne.s32.totalorder %s157, %s158
      %p172 = scmp.eq.s32.totalorder %s20, 11
      %p173 = por %p171, %p172
      %p175 = scmp.ne.s32.totalorder %s158, %s174
      %p176 = scmp.eq.s32.totalorder %s20, 0
      %p177 = por %p175, %p176
      %p178 = scmp.le.s32.totalorder 1, %s14
      %p179 = scmp.lt.s32.totalorder %s14, 13
      %p180 = pnand %p178, %p179
      %p181 = pneg %p180
      // Predicated region
      $region9: #{tpu_custom_call.1} parent=5 // pred_check
        _
      $region10: #{tpu_custom_call.1} parent=5 // pred_check_branch
        %183 = sbr.rel (%p180) target = $region12
      $region11: #{tpu_custom_call.1} parent=5 // pred_region
        %s184 = ssub.s32 %s14, 1
        // Predicated region
        $region13: #{tpu_custom_call.1} parent=11 // pred_check
          %p185 = pneg %p77
        $region14: #{tpu_custom_call.1} parent=11 // pred_check_branch
          %187 = sbr.rel (%p185) target = $region16
        $region15: #{tpu_custom_call.1} parent=11 // pred_region
          _
        $region16: #{tpu_custom_call.1} parent=11 // pred_fallthru
          _
        // Predicated region
        $region17: #{tpu_custom_call.1} parent=11 // pred_check
          %p188 = pneg %p98
        $region18: #{tpu_custom_call.1} parent=11 // pred_check_branch
          %190 = sbr.rel (%p188) target = $region20
        $region19: #{tpu_custom_call.1} parent=11 // pred_region
          _
        $region20: #{tpu_custom_call.1} parent=11 // pred_fallthru
          _
        // Predicated region
        $region21: #{tpu_custom_call.1} parent=11 // pred_check
          %p191 = pneg %p119
        $region22: #{tpu_custom_call.1} parent=11 // pred_check_branch
          %193 = sbr.rel (%p191) target = $region24
        $region23: #{tpu_custom_call.1} parent=11 // pred_region
          _
        $region24: #{tpu_custom_call.1} parent=11 // pred_fallthru
          _
        // Predicated region
        $region25: #{tpu_custom_call.1} parent=11 // pred_check
          %p194 = pneg %p140
        $region26: #{tpu_custom_call.1} parent=11 // pred_check_branch
          %196 = sbr.rel (%p194) target = $region28
        $region27: #{tpu_custom_call.1} parent=11 // pred_region
          _
        $region28: #{tpu_custom_call.1} parent=11 // pred_fallthru
          _
      $region12: #{tpu_custom_call.1} parent=5 // pred_fallthru
        _
      %p197 = scmp.lt.s32.totalorder %s14, 12
      // Predicated region
      $region29: #{tpu_custom_call.1} parent=5 // pred_check
        %p198 = pneg %p197
      $region30: #{tpu_custom_call.1} parent=5 // pred_check_branch
        %200 = sbr.rel (%p198) target = $region32
      $region31: #{tpu_custom_call.1} parent=5 // pred_region
        // Predicated region
        $region33: #{tpu_custom_call.1} parent=31 // pred_check
          %p201 = pneg %p50
        $region34: #{tpu_custom_call.1} parent=31 // pred_check_branch
          %203 = sbr.rel (%p201) target = $region36
        $region35: #{tpu_custom_call.1} parent=31 // pred_region
          %p204 = scmp.eq.s32.totalorder %s21, 0
          %s205 = scalar_select %p204, %s22, 0
          %s206 = smul.u32 8, %s205
          %p207 = scmp.lt.s32.totalorder %s206, 31
          %s208 = scalar_select %p207, %s206, 31
          %s209 = smul.addr %s208, 7
          %s210 = smul.addr %s209, 4
          %s211 = scalar_lea.vmem %s0, %s210
          %p212 = scmp.eq.s32.totalorder %s21, 0
          %s213 = scalar_select %p212, %s22, 0
          %s214 = smul.u32 8, %s213
        $region36: #{tpu_custom_call.1} parent=31 // pred_fallthru
          _
      $region32: #{tpu_custom_call.1} parent=5 // pred_fallthru
        _
      %p215 = scmp.le.s32.totalorder 1, %s14
      %p216 = scmp.lt.s32.totalorder %s14, 13
      %p217 = pnand %p215, %p216
      %p218 = pneg %p217
      // Predicated region
      $region37: #{tpu_custom_call.1} parent=5 // pred_check
        _
      $region38: #{tpu_custom_call.1} parent=5 // pred_check_branch
        %220 = sbr.rel (%p217) target = $region40
      $region39: #{tpu_custom_call.1} parent=5 // pred_region
        %s221 = ssub.s32 %s14, 1
        %p222 = scmp.eq.s32.totalorder %s23, 0
        %s223 = scalar_select %p222, %s24, 0
        %s224 = smul.u32 8, %s223
        %p225 = scmp.lt.s32.totalorder %s224, 31
        %s226 = scalar_select %p225, %s224, 31
        %s227 = smul.addr %s226, 7
        %s228 = smul.addr %s227, 4
        %s229 = scalar_lea.vmem %s0, %s228
        %p230 = pneg %p56
        %p231 = pneg %p53
        %p232 = pneg %p77
        %p233 = pneg %p74
        %p234 = pneg %p98
        %p235 = pneg %p95
        %p236 = pneg %p119
        %p237 = pneg %p116
        %p238 = pneg %p140
        %p239 = pneg %p137
        %p240 = pneg %p170
        %p241 = pneg %p167
        %s242 = sand.u32 %s157, 1
        %s243 = scalar_lea.sflag [#allocation6], %s242
        %s244 = sand.u32 %s157, 1
        %s245 = smul.addr %s244, 64
        %s246 = scalar_lea.vmem [#allocation5], %s245
        %p247 = scmp.eq.s32.totalorder %s23, 0
        %s248 = scalar_select %p247, %s24, 0
        %s249 = smul.u32 8, %s248
        %p250 = scmp.lt.s32.totalorder %s249, 31
        %s251 = scalar_select %p250, %s249, 31
        %s252 = smul.addr %s251, 7
        %s253 = smul.addr %s252, 4
        %s254 = scalar_lea.vmem %s0, %s253
        %p255 = scmp.eq.s32.totalorder %s23, 0
        %s256 = scalar_select %p255, %s24, 0
        %s257 = smul.u32 8, %s256
        %p258 = scmp.eq.s32.totalorder %s23, 2
        %s259 = scalar_select %p258, %s24, 0
        %s260 = smul.u32 8, %s259
        %s262 = smul.u32 %s24, 64
        %v263 = vlaneseq
        %v264 = vshrl.u32 %v263, 7
        %v265 = vadd.s32 %v264, 8
        %v266 = vadd.s32 %v264, 16
        %v267 = vadd.s32 %v264, 24
        %v268 = vadd.s32 %v264, 32
        %v269 = vadd.s32 %v264, 40
        %v270 = vadd.s32 %v264, 48
        %v271 = vadd.s32 %v264, 56
        %v272 = vstv %s262
        %v273 = vadd.s32 %v272, %v264
        %v274 = vadd.s32 %v272, %v265
        %v275 = vadd.s32 %v272, %v266
        %v276 = vadd.s32 %v272, %v267
        %v277 = vadd.s32 %v272, %v268
        %v278 = vadd.s32 %v272, %v269
        %v279 = vadd.s32 %v272, %v270
        %v280 = vadd.s32 %v272, %v271
        %vm281 = vcmp.lt.s32.totalorder %v273, 200
        %vm282 = vcmp.lt.s32.totalorder %v274, 200
        %vm283 = vcmp.lt.s32.totalorder %v275, 200
        %vm284 = vcmp.lt.s32.totalorder %v276, 200
        %vm285 = vcmp.lt.s32.totalorder %v277, 200
        %vm286 = vcmp.lt.s32.totalorder %v278, 200
        %vm287 = vcmp.lt.s32.totalorder %v279, 200
        %vm288 = vcmp.lt.s32.totalorder %v280, 200
        %v289 = vsel %vm281, 1, 0
        %v290 = vsel %vm282, 1, 0
        %v291 = vsel %vm283, 1, 0
        %v292 = vsel %vm284, 1, 0
        %v293 = vsel %vm285, 1, 0
        %v294 = vsel %vm286, 1, 0
        %v295 = vsel %vm287, 1, 0
        %v296 = vsel %vm288, 1, 0
        %v297 = vcvt.s32.f32 %v289
        %v298 = vcvt.s32.f32 %v290
        %v299 = vcvt.s32.f32 %v291
        %v300 = vcvt.s32.f32 %v292
        %v301 = vcvt.s32.f32 %v293
        %v302 = vcvt.s32.f32 %v294
        %v303 = vcvt.s32.f32 %v295
        %v304 = vcvt.s32.f32 %v296
        %p305 = scmp.eq.s32.totalorder %s23, 0
        // Predicated region
        $region41: #{tpu_custom_call.1} parent=39 // pred_check
          %p306 = pneg %p305
        $region42: #{tpu_custom_call.1} parent=39 // pred_check_branch
          %308 = sbr.rel (%p306) target = $region44
        $region43: #{tpu_custom_call.1} parent=39 // pred_region
          %p309 = scmp.eq.s32.totalorder %s24, 0
          // Predicated region
          $region45: #{tpu_custom_call.1} parent=43 // pred_check
            %p310 = pneg %p309
          $region46: #{tpu_custom_call.1} parent=43 // pred_check_branch
            %312 = sbr.rel (%p310) target = $region48
          $region47: #{tpu_custom_call.1} parent=43 // pred_region
            %313 = vst [vmem:[#allocation4] sm:$0x3] 0.0
            %314 = vst [vmem:[#allocation4 + $0x8] sm:$0x3] 0.0
          $region48: #{tpu_custom_call.1} parent=43 // pred_fallthru
            _
          %v315 = vld [vmem:[%s254] sm:$0xff]
          %v316 = vld [vmem:[%s254 + $0x8] sm:$0xff]
          %v317 = vld [vmem:[%s254 + $0x10] sm:$0xff]
          %v318 = vld [vmem:[%s254 + $0x18] sm:$0xf]
          %v319 = vld [vmem:[%s254 + $0x1c] sm:$0xff]
          %v320 = vld [vmem:[%s254 + $0x24] sm:$0xff]
          %v321 = vld [vmem:[%s254 + $0x2c] sm:$0xff]
          %v322 = vld [vmem:[%s254 + $0x34] sm:$0xf]
          %v323 = vld [vmem:[%s254 + $0x38] sm:$0xff]
          %v324 = vld [vmem:[%s254 + $0x40] sm:$0xff]
          %v325 = vld [vmem:[%s254 + $0x48] sm:$0xff]
          %v326 = vld [vmem:[%s254 + $0x50] sm:$0xf]
          %v327 = vld [vmem:[%s254 + $0x54] sm:$0xff]
          %v328 = vld [vmem:[%s254 + $0x5c] sm:$0xff]
          %v329 = vld [vmem:[%s254 + $0x64] sm:$0xff]
          %v330 = vld [vmem:[%s254 + $0x6c] sm:$0xf]
          %v331 = vld [vmem:[%s254 + $0x70] sm:$0xff]
          %v332 = vld [vmem:[%s254 + $0x78] sm:$0xff]
          %v333 = vld [vmem:[%s254 + $0x80] sm:$0xff]
          %v334 = vld [vmem:[%s254 + $0x88] sm:$0xf]
          %v335 = vld [vmem:[%s254 + $0x8c] sm:$0xff]
          %v336 = vld [vmem:[%s254 + $0x94] sm:$0xff]
          %v337 = vld [vmem:[%s254 + $0x9c] sm:$0xff]
          %v338 = vld [vmem:[%s254 + $0xa4] sm:$0xf]
          %v339 = vld [vmem:[%s254 + $0xa8] sm:$0xff]
          %v340 = vld [vmem:[%s254 + $0xb0] sm:$0xff]
          %v341 = vld [vmem:[%s254 + $0xb8] sm:$0xff]
          %v342 = vld [vmem:[%s254 + $0xc0] sm:$0xf]
          %v343 = vld [vmem:[%s254 + $0xc4] sm:$0xff]
          %v344 = vld [vmem:[%s254 + $0xcc] sm:$0xff]
          %v345 = vld [vmem:[%s254 + $0xd4] sm:$0xff]
          %v346 = vld [vmem:[%s254 + $0xdc] sm:$0xf]
          %v347 = vld [vmem:[%s1] sm:$0xff]
          %v348 = vld [vmem:[%s1 + $0x8] sm:$0xff]
          %v349 = vld [vmem:[%s1 + $0x10] sm:$0xff]
          %v350 = vld [vmem:[%s1 + $0x18] sm:$0xff]
          %v351 = vld [vmem:[%s1 + $0x20] sm:$0xff]
          %v352 = vld [vmem:[%s1 + $0x28] sm:$0xff]
          %v353 = vld [vmem:[%s1 + $0x30] sm:$0xff]
          %v354 = vld [vmem:[%s1 + $0x38] sm:$0xff]
          %v355 = vld [vmem:[%s1 + $0x40] sm:$0xff]
          %v356 = vld [vmem:[%s1 + $0x48] sm:$0xff]
          %v357 = vld [vmem:[%s1 + $0x50] sm:$0xff]
          %v358 = vld [vmem:[%s1 + $0x58] sm:$0xff]
          %v359 = vld [vmem:[%s1 + $0x60] sm:$0xff]
          %v360 = vld [vmem:[%s1 + $0x68] sm:$0xff]
          %v361 = vld [vmem:[%s1 + $0x70] sm:$0xff]
          %v362 = vld [vmem:[%s1 + $0x78] sm:$0xff]
          %v363 = vld [vmem:[%s1 + $0x80] sm:$0xff]
          %v364 = vld [vmem:[%s1 + $0x88] sm:$0xff]
          %v365 = vld [vmem:[%s1 + $0x90] sm:$0xff]
          %v366 = vld [vmem:[%s1 + $0x98] sm:$0xff]
          %v367 = vld [vmem:[%s1 + $0xa0] sm:$0xff]
          %v368 = vld [vmem:[%s1 + $0xa8] sm:$0xff]
          %v369 = vld [vmem:[%s1 + $0xb0] sm:$0xff]
          %v370 = vld [vmem:[%s1 + $0xb8] sm:$0xff]
          %v371 = vld [vmem:[%s1 + $0xc0] sm:$0xff]
          %v372 = vld [vmem:[%s1 + $0xc8] sm:$0xff]
          %v373 = vld [vmem:[%s1 + $0xd0] sm:$0xff]
          %v374 = vld [vmem:[%s1 + $0xd8] sm:$0xff]
          %v375 = vld [vmem:[%s1 + $0xe0] sm:$0xff]
          %v376 = vld [vmem:[%s1 + $0xe8] sm:$0xff]
          %v377 = vld [vmem:[%s1 + $0xf0] sm:$0xff]
          %v378 = vld [vmem:[%s1 + $0xf8] sm:$0xff]
          %v379 = vld [vmem:[%s1 + $0x100] sm:$0xff]
          %v380 = vld [vmem:[%s1 + $0x108] sm:$0xff]
          %v381 = vld [vmem:[%s1 + $0x110] sm:$0xff]
          %v382 = vld [vmem:[%s1 + $0x118] sm:$0xff]
          %v383 = vld [vmem:[%s1 + $0x120] sm:$0xff]
          %v384 = vld [vmem:[%s1 + $0x128] sm:$0xff]
          %v385 = vld [vmem:[%s1 + $0x130] sm:$0xff]
          %v386 = vld [vmem:[%s1 + $0x138] sm:$0xff]
          %v387 = vld [vmem:[%s1 + $0x140] sm:$0xff]
          %v388 = vld [vmem:[%s1 + $0x148] sm:$0xff]
          %v389 = vld [vmem:[%s1 + $0x150] sm:$0xff]
          %v390 = vld [vmem:[%s1 + $0x158] sm:$0xff]
          %v391 = vld [vmem:[%s1 + $0x160] sm:$0xff]
          %v392 = vld [vmem:[%s1 + $0x168] sm:$0xff]
          %v393 = vld [vmem:[%s1 + $0x170] sm:$0xff]
          %v394 = vld [vmem:[%s1 + $0x178] sm:$0xff]
          %v395 = vld [vmem:[%s1 + $0x180] sm:$0xff]
          %v396 = vld [vmem:[%s1 + $0x188] sm:$0xff]
          %v397 = vld [vmem:[%s1 + $0x190] sm:$0xff]
          %v398 = vld [vmem:[%s1 + $0x198] sm:$0xff]
          %v399 = vld [vmem:[%s1 + $0x1a0] sm:$0xff]
          %v400 = vld [vmem:[%s1 + $0x1a8] sm:$0xff]
          %v401 = vld [vmem:[%s1 + $0x1b0] sm:$0xff]
          %v402 = vld [vmem:[%s1 + $0x1b8] sm:$0xff]
          %v403 = vld [vmem:[%s1 + $0x1c0] sm:$0xff]
          %v404 = vld [vmem:[%s1 + $0x1c8] sm:$0xff]
          %v405 = vld [vmem:[%s1 + $0x1d0] sm:$0xff]
          %v406 = vld [vmem:[%s1 + $0x1d8] sm:$0xff]
          %v407 = vld [vmem:[%s1 + $0x1e0] sm:$0xff]
          %v408 = vld [vmem:[%s1 + $0x1e8] sm:$0xff]
          %v409 = vld [vmem:[%s1 + $0x1f0] sm:$0xff]
          %v410 = vld [vmem:[%s1 + $0x1f8] sm:$0xff]
          %v411 = vld [vmem:[%s1 + $0x200] sm:$0xff]
          %v412 = vld [vmem:[%s1 + $0x208] sm:$0xff]
          %v413 = vld [vmem:[%s1 + $0x210] sm:$0xff]
          %v414 = vld [vmem:[%s1 + $0x218] sm:$0xff]
          %v415 = vld [vmem:[%s1 + $0x220] sm:$0xff]
          %v416 = vld [vmem:[%s1 + $0x228] sm:$0xff]
          %v417 = vld [vmem:[%s1 + $0x230] sm:$0xff]
          %v418 = vld [vmem:[%s1 + $0x238] sm:$0xff]
          %v419 = vld [vmem:[%s1 + $0x240] sm:$0xff]
          %v420 = vld [vmem:[%s1 + $0x248] sm:$0xff]
          %v421 = vld [vmem:[%s1 + $0x250] sm:$0xff]
          %v422 = vld [vmem:[%s1 + $0x258] sm:$0xff]
          %v423 = vld [vmem:[%s1 + $0x260] sm:$0xff]
          %v424 = vld [vmem:[%s1 + $0x268] sm:$0xff]
          %v425 = vld [vmem:[%s1 + $0x270] sm:$0xff]
          %v426 = vld [vmem:[%s1 + $0x278] sm:$0xff]
          %v427 = vld [vmem:[%s1 + $0x280] sm:$0xff]
          %v428 = vld [vmem:[%s1 + $0x288] sm:$0xff]
          %v429 = vld [vmem:[%s1 + $0x290] sm:$0xff]
          %v430 = vld [vmem:[%s1 + $0x298] sm:$0xff]
          %v431 = vld [vmem:[%s1 + $0x2a0] sm:$0xff]
          %v432 = vld [vmem:[%s1 + $0x2a8] sm:$0xff]
          %v433 = vld [vmem:[%s1 + $0x2b0] sm:$0xff]
          %v434 = vld [vmem:[%s1 + $0x2b8] sm:$0xff]
          %v435 = vld [vmem:[%s1 + $0x2c0] sm:$0xff]
          %v436 = vld [vmem:[%s1 + $0x2c8] sm:$0xff]
          %v437 = vld [vmem:[%s1 + $0x2d0] sm:$0xff]
          %v438 = vld [vmem:[%s1 + $0x2d8] sm:$0xff]
          %v439 = vld [vmem:[%s1 + $0x2e0] sm:$0xff]
          %v440 = vld [vmem:[%s1 + $0x2e8] sm:$0xff]
          %v441 = vld [vmem:[%s1 + $0x2f0] sm:$0xff]
          %v442 = vld [vmem:[%s1 + $0x2f8] sm:$0xff]
          %v443 = vld [vmem:[%s1 + $0x300] sm:$0xff]
          %v444 = vld [vmem:[%s1 + $0x308] sm:$0xff]
          %v477 = vunpack.c.l.b16 %v315
          %v478 = vunpack.c.h.b16 %v315
          %v479 = vunpack.c.l.b16 %v316
          %v480 = vunpack.c.h.b16 %v316
          %v481 = vunpack.c.l.b16 %v317
          %v482 = vunpack.c.h.b16 %v317
          %v483 = vunpack.c.l.b16 %v318
          %v484 = vunpack.c.l.b16 %v319
          %v485 = vunpack.c.h.b16 %v319
          %v486 = vunpack.c.l.b16 %v320
          %v487 = vunpack.c.h.b16 %v320
          %v488 = vunpack.c.l.b16 %v321
          %v489 = vunpack.c.h.b16 %v321
          %v490 = vunpack.c.l.b16 %v322
          %v491 = vunpack.c.l.b16 %v323
          %v492 = vunpack.c.h.b16 %v323
          %v493 = vunpack.c.l.b16 %v324
          %v494 = vunpack.c.h.b16 %v324
          %v495 = vunpack.c.l.b16 %v325
          %v496 = vunpack.c.h.b16 %v325
          %v497 = vunpack.c.l.b16 %v326
          %v498 = vunpack.c.l.b16 %v327
          %v499 = vunpack.c.h.b16 %v327
          %v500 = vunpack.c.l.b16 %v328
          %v501 = vunpack.c.h.b16 %v328
          %v502 = vunpack.c.l.b16 %v329
          %v503 = vunpack.c.h.b16 %v329
          %v504 = vunpack.c.l.b16 %v330
          %v505 = vunpack.c.l.b16 %v331
          %v506 = vunpack.c.h.b16 %v331
          %v507 = vunpack.c.l.b16 %v332
          %v508 = vunpack.c.h.b16 %v332
          %v509 = vunpack.c.l.b16 %v333
          %v510 = vunpack.c.h.b16 %v333
          %v511 = vunpack.c.l.b16 %v334
          %v512 = vunpack.c.l.b16 %v335
          %v513 = vunpack.c.h.b16 %v335
          %v514 = vunpack.c.l.b16 %v336
          %v515 = vunpack.c.h.b16 %v336
          %v516 = vunpack.c.l.b16 %v337
          %v517 = vunpack.c.h.b16 %v337
          %v518 = vunpack.c.l.b16 %v338
          %v519 = vunpack.c.l.b16 %v339
          %v520 = vunpack.c.h.b16 %v339
          %v521 = vunpack.c.l.b16 %v340
          %v522 = vunpack.c.h.b16 %v340
          %v523 = vunpack.c.l.b16 %v341
          %v524 = vunpack.c.h.b16 %v341
          %v525 = vunpack.c.l.b16 %v342
          %v526 = vunpack.c.l.b16 %v343
          %v527 = vunpack.c.h.b16 %v343
          %v528 = vunpack.c.l.b16 %v344
          %v529 = vunpack.c.h.b16 %v344
          %v530 = vunpack.c.l.b16 %v345
          %v531 = vunpack.c.h.b16 %v345
          %v532 = vunpack.c.l.b16 %v346
          %v533 = vpack.c.b16 %v484, %v477
          %v534 = vpack.c.b16 %v485, %v478
          %v535 = vpack.c.b16 %v486, %v479
          %v536 = vpack.c.b16 %v487, %v480
          %v537 = vpack.c.b16 %v488, %v481
          %v538 = vpack.c.b16 %v489, %v482
          %v539 = vpack.c.b16 %v490, %v483
          %v540 = vpack.c.b16 %v498, %v491
          %v541 = vpack.c.b16 %v499, %v492
          %v542 = vpack.c.b16 %v500, %v493
          %v543 = vpack.c.b16 %v501, %v494
          %v544 = vpack.c.b16 %v502, %v495
          %v545 = vpack.c.b16 %v503, %v496
          %v546 = vpack.c.b16 %v504, %v497
          %v547 = vpack.c.b16 %v512, %v505
          %v548 = vpack.c.b16 %v513, %v506
          %v549 = vpack.c.b16 %v514, %v507
          %v550 = vpack.c.b16 %v515, %v508
          %v551 = vpack.c.b16 %v516, %v509
          %v552 = vpack.c.b16 %v517, %v510
          %v553 = vpack.c.b16 %v518, %v511
          %v554 = vpack.c.b16 %v526, %v519
          %v555 = vpack.c.b16 %v527, %v520
          %v556 = vpack.c.b16 %v528, %v521
          %v557 = vpack.c.b16 %v529, %v522
          %v558 = vpack.c.b16 %v530, %v523
          %v559 = vpack.c.b16 %v531, %v524
          %v560 = vpack.c.b16 %v532, %v525
          %v683 = vunpack.c.l.b16 %v347
          %v684 = vunpack.c.h.b16 %v347
          %v685 = vunpack.c.l.b16 %v348
          %v686 = vunpack.c.h.b16 %v348
          %v687 = vunpack.c.l.b16 %v349
          %v688 = vunpack.c.h.b16 %v349
          %v689 = vunpack.c.l.b16 %v350
          %v690 = vunpack.c.h.b16 %v350
          %v691 = vunpack.c.l.b16 %v351
          %v692 = vunpack.c.h.b16 %v351
          %v693 = vunpack.c.l.b16 %v352
          %v694 = vunpack.c.h.b16 %v352
          %v695 = vunpack.c.l.b16 %v353
          %v696 = vunpack.c.h.b16 %v353
          %v697 = vunpack.c.l.b16 %v354
          %v698 = vunpack.c.h.b16 %v354
          %v699 = vunpack.c.l.b16 %v355
          %v700 = vunpack.c.h.b16 %v355
          %v701 = vunpack.c.l.b16 %v356
          %v702 = vunpack.c.h.b16 %v356
          %v703 = vunpack.c.l.b16 %v357
          %v704 = vunpack.c.h.b16 %v357
          %v705 = vunpack.c.l.b16 %v358
          %v706 = vunpack.c.h.b16 %v358
          %v707 = vunpack.c.l.b16 %v359
          %v708 = vunpack.c.h.b16 %v359
          %v709 = vunpack.c.l.b16 %v360
          %v710 = vunpack.c.h.b16 %v360
          %v711 = vunpack.c.l.b16 %v361
          %v712 = vunpack.c.h.b16 %v361
          %v713 = vunpack.c.l.b16 %v362
          %v714 = vunpack.c.h.b16 %v362
          %v715 = vunpack.c.l.b16 %v363
          %v716 = vunpack.c.h.b16 %v363
          %v717 = vunpack.c.l.b16 %v364
          %v718 = vunpack.c.h.b16 %v364
          %v719 = vunpack.c.l.b16 %v365
          %v720 = vunpack.c.h.b16 %v365
          %v721 = vunpack.c.l.b16 %v366
          %v722 = vunpack.c.h.b16 %v366
          %v723 = vunpack.c.l.b16 %v367
          %v724 = vunpack.c.h.b16 %v367
          %v725 = vunpack.c.l.b16 %v368
          %v726 = vunpack.c.h.b16 %v368
          %v727 = vunpack.c.l.b16 %v369
          %v728 = vunpack.c.h.b16 %v369
          %v729 = vunpack.c.l.b16 %v370
          %v730 = vunpack.c.h.b16 %v370
          %v731 = vunpack.c.l.b16 %v371
          %v732 = vunpack.c.h.b16 %v371
          %v733 = vunpack.c.l.b16 %v372
          %v734 = vunpack.c.h.b16 %v372
          %v735 = vunpack.c.l.b16 %v373
          %v736 = vunpack.c.h.b16 %v373
          %v737 = vunpack.c.l.b16 %v374
          %v738 = vunpack.c.h.b16 %v374
          %v739 = vunpack.c.l.b16 %v375
          %v740 = vunpack.c.h.b16 %v375
          %v741 = vunpack.c.l.b16 %v376
          %v742 = vunpack.c.h.b16 %v376
          %v743 = vunpack.c.l.b16 %v377
          %v744 = vunpack.c.h.b16 %v377
          %v745 = vunpack.c.l.b16 %v378
          %v746 = vunpack.c.h.b16 %v378
          %v747 = vunpack.c.l.b16 %v379
          %v748 = vunpack.c.h.b16 %v379
          %v749 = vunpack.c.l.b16 %v380
          %v750 = vunpack.c.h.b16 %v380
          %v751 = vunpack.c.l.b16 %v381
          %v752 = vunpack.c.h.b16 %v381
          %v753 = vunpack.c.l.b16 %v382
          %v754 = vunpack.c.h.b16 %v382
          %v755 = vunpack.c.l.b16 %v383
          %v756 = vunpack.c.h.b16 %v383
          %v757 = vunpack.c.l.b16 %v384
          %v758 = vunpack.c.h.b16 %v384
          %v759 = vunpack.c.l.b16 %v385
          %v760 = vunpack.c.h.b16 %v385
          %v761 = vunpack.c.l.b16 %v386
          %v762 = vunpack.c.h.b16 %v386
          %v763 = vunpack.c.l.b16 %v387
          %v764 = vunpack.c.h.b16 %v387
          %v765 = vunpack.c.l.b16 %v388
          %v766 = vunpack.c.h.b16 %v388
          %v767 = vunpack.c.l.b16 %v389
          %v768 = vunpack.c.h.b16 %v389
          %v769 = vunpack.c.l.b16 %v390
          %v770 = vunpack.c.h.b16 %v390
          %v771 = vunpack.c.l.b16 %v391
          %v772 = vunpack.c.h.b16 %v391
          %v773 = vunpack.c.l.b16 %v392
          %v774 = vunpack.c.h.b16 %v392
          %v775 = vunpack.c.l.b16 %v393
          %v776 = vunpack.c.h.b16 %v393
          %v777 = vunpack.c.l.b16 %v394
          %v778 = vunpack.c.h.b16 %v394
          %v779 = vunpack.c.l.b16 %v395
          %v780 = vunpack.c.h.b16 %v395
          %v781 = vunpack.c.l.b16 %v396
          %v782 = vunpack.c.h.b16 %v396
          %v783 = vunpack.c.l.b16 %v397
          %v784 = vunpack.c.h.b16 %v397
          %v785 = vunpack.c.l.b16 %v398
          %v786 = vunpack.c.h.b16 %v398
          %v787 = vunpack.c.l.b16 %v399
          %v788 = vunpack.c.h.b16 %v399
          %v789 = vunpack.c.l.b16 %v400
          %v790 = vunpack.c.h.b16 %v400
          %v791 = vunpack.c.l.b16 %v401
          %v792 = vunpack.c.h.b16 %v401
          %v793 = vunpack.c.l.b16 %v402
          %v794 = vunpack.c.h.b16 %v402
          %v795 = vunpack.c.l.b16 %v403
          %v796 = vunpack.c.h.b16 %v403
          %v797 = vunpack.c.l.b16 %v404
          %v798 = vunpack.c.h.b16 %v404
          %v799 = vunpack.c.l.b16 %v405
          %v800 = vunpack.c.h.b16 %v405
          %v801 = vunpack.c.l.b16 %v406
          %v802 = vunpack.c.h.b16 %v406
          %v803 = vunpack.c.l.b16 %v407
          %v804 = vunpack.c.h.b16 %v407
          %v805 = vunpack.c.l.b16 %v408
          %v806 = vunpack.c.h.b16 %v408
          %v807 = vunpack.c.l.b16 %v409
          %v808 = vunpack.c.h.b16 %v409
          %v809 = vunpack.c.l.b16 %v410
          %v810 = vunpack.c.h.b16 %v410
          %v811 = vunpack.c.l.b16 %v411
          %v812 = vunpack.c.h.b16 %v411
          %v813 = vunpack.c.l.b16 %v412
          %v814 = vunpack.c.h.b16 %v412
          %v815 = vunpack.c.l.b16 %v413
          %v816 = vunpack.c.h.b16 %v413
          %v817 = vunpack.c.l.b16 %v414
          %v818 = vunpack.c.h.b16 %v414
          %v819 = vunpack.c.l.b16 %v415
          %v820 = vunpack.c.h.b16 %v415
          %v821 = vunpack.c.l.b16 %v416
          %v822 = vunpack.c.h.b16 %v416
          %v823 = vunpack.c.l.b16 %v417
          %v824 = vunpack.c.h.b16 %v417
          %v825 = vunpack.c.l.b16 %v418
          %v826 = vunpack.c.h.b16 %v418
          %v827 = vunpack.c.l.b16 %v419
          %v828 = vunpack.c.h.b16 %v419
          %v829 = vunpack.c.l.b16 %v420
          %v830 = vunpack.c.h.b16 %v420
          %v831 = vunpack.c.l.b16 %v421
          %v832 = vunpack.c.h.b16 %v421
          %v833 = vunpack.c.l.b16 %v422
          %v834 = vunpack.c.h.b16 %v422
          %v835 = vunpack.c.l.b16 %v423
          %v836 = vunpack.c.h.b16 %v423
          %v837 = vunpack.c.l.b16 %v424
          %v838 = vunpack.c.h.b16 %v424
          %v839 = vunpack.c.l.b16 %v425
          %v840 = vunpack.c.h.b16 %v425
          %v841 = vunpack.c.l.b16 %v426
          %v842 = vunpack.c.h.b16 %v426
          %v843 = vunpack.c.l.b16 %v427
          %v844 = vunpack.c.h.b16 %v427
          %v845 = vunpack.c.l.b16 %v428
          %v846 = vunpack.c.h.b16 %v428
          %v847 = vunpack.c.l.b16 %v429
          %v848 = vunpack.c.h.b16 %v429
          %v849 = vunpack.c.l.b16 %v430
          %v850 = vunpack.c.h.b16 %v430
          %v851 = vunpack.c.l.b16 %v431
          %v852 = vunpack.c.h.b16 %v431
          %v853 = vunpack.c.l.b16 %v432
          %v854 = vunpack.c.h.b16 %v432
          %v855 = vunpack.c.l.b16 %v433
          %v856 = vunpack.c.h.b16 %v433
          %v857 = vunpack.c.l.b16 %v434
          %v858 = vunpack.c.h.b16 %v434
          %v859 = vunpack.c.l.b16 %v435
          %v860 = vunpack.c.h.b16 %v435
          %v861 = vunpack.c.l.b16 %v436
          %v862 = vunpack.c.h.b16 %v436
          %v863 = vunpack.c.l.b16 %v437
          %v864 = vunpack.c.h.b16 %v437
          %v865 = vunpack.c.l.b16 %v438
          %v866 = vunpack.c.h.b16 %v438
          %v867 = vunpack.c.l.b16 %v439
          %v868 = vunpack.c.h.b16 %v439
          %v869 = vunpack.c.l.b16 %v440
          %v870 = vunpack.c.h.b16 %v440
          %v871 = vunpack.c.l.b16 %v441
          %v872 = vunpack.c.h.b16 %v441
          %v873 = vunpack.c.l.b16 %v442
          %v874 = vunpack.c.h.b16 %v442
          %v875 = vunpack.c.l.b16 %v443
          %v876 = vunpack.c.h.b16 %v443
          %v877 = vunpack.c.l.b16 %v444
          %v878 = vunpack.c.h.b16 %v444
          %v879 = vpack.c.b16 %v685, %v683
          %v880 = vpack.c.b16 %v686, %v684
          %v881 = vpack.c.b16 %v689, %v687
          %v882 = vpack.c.b16 %v690, %v688
          %v883 = vpack.c.b16 %v693, %v691
          %v884 = vpack.c.b16 %v694, %v692
          %v885 = vpack.c.b16 %v697, %v695
          %v886 = vpack.c.b16 %v698, %v696
          %v887 = vpack.c.b16 %v701, %v699
          %v888 = vpack.c.b16 %v702, %v700
          %v889 = vpack.c.b16 %v705, %v703
          %v890 = vpack.c.b16 %v706, %v704
          %v891 = vpack.c.b16 %v709, %v707
          %v892 = vpack.c.b16 %v710, %v708
          %v893 = vpack.c.b16 %v713, %v711
          %v894 = vpack.c.b16 %v714, %v712
          %v895 = vpack.c.b16 %v717, %v715
          %v896 = vpack.c.b16 %v718, %v716
          %v897 = vpack.c.b16 %v721, %v719
          %v898 = vpack.c.b16 %v722, %v720
          %v899 = vpack.c.b16 %v725, %v723
          %v900 = vpack.c.b16 %v726, %v724
          %v901 = vpack.c.b16 %v729, %v727
          %v902 = vpack.c.b16 %v730, %v728
          %v903 = vpack.c.b16 %v733, %v731
          %v904 = vpack.c.b16 %v734, %v732
          %v905 = vpack.c.b16 %v737, %v735
          %v906 = vpack.c.b16 %v738, %v736
          %v907 = vpack.c.b16 %v741, %v739
          %v908 = vpack.c.b16 %v742, %v740
          %v909 = vpack.c.b16 %v745, %v743
          %v910 = vpack.c.b16 %v746, %v744
          %v911 = vpack.c.b16 %v749, %v747
          %v912 = vpack.c.b16 %v750, %v748
          %v913 = vpack.c.b16 %v753, %v751
          %v914 = vpack.c.b16 %v754, %v752
          %v915 = vpack.c.b16 %v757, %v755
          %v916 = vpack.c.b16 %v758, %v756
          %v917 = vpack.c.b16 %v761, %v759
          %v918 = vpack.c.b16 %v762, %v760
          %v919 = vpack.c.b16 %v765, %v763
          %v920 = vpack.c.b16 %v766, %v764
          %v921 = vpack.c.b16 %v769, %v767
          %v922 = vpack.c.b16 %v770, %v768
          %v923 = vpack.c.b16 %v773, %v771
          %v924 = vpack.c.b16 %v774, %v772
          %v925 = vpack.c.b16 %v777, %v775
          %v926 = vpack.c.b16 %v778, %v776
          %v927 = vpack.c.b16 %v781, %v779
          %v928 = vpack.c.b16 %v782, %v780
          %v929 = vpack.c.b16 %v785, %v783
          %v930 = vpack.c.b16 %v786, %v784
          %v931 = vpack.c.b16 %v789, %v787
          %v932 = vpack.c.b16 %v790, %v788
          %v933 = vpack.c.b16 %v793, %v791
          %v934 = vpack.c.b16 %v794, %v792
          %v935 = vpack.c.b16 %v797, %v795
          %v936 = vpack.c.b16 %v798, %v796
          %v937 = vpack.c.b16 %v801, %v799
          %v938 = vpack.c.b16 %v802, %v800
          %v939 = vpack.c.b16 %v805, %v803
          %v940 = vpack.c.b16 %v806, %v804
          %v941 = vpack.c.b16 %v809, %v807
          %v942 = vpack.c.b16 %v810, %v808
          %v943 = vpack.c.b16 %v813, %v811
          %v944 = vpack.c.b16 %v814, %v812
          %v945 = vpack.c.b16 %v817, %v815
          %v946 = vpack.c.b16 %v818, %v816
          %v947 = vpack.c.b16 %v821, %v819
          %v948 = vpack.c.b16 %v822, %v820
          %v949 = vpack.c.b16 %v825, %v823
          %v950 = vpack.c.b16 %v826, %v824
          %v951 = vpack.c.b16 %v829, %v827
          %v952 = vpack.c.b16 %v830, %v828
          %v953 = vpack.c.b16 %v833, %v831
          %v954 = vpack.c.b16 %v834, %v832
          %v955 = vpack.c.b16 %v837, %v835
          %v956 = vpack.c.b16 %v838, %v836
          %v957 = vpack.c.b16 %v841, %v839
          %v958 = vpack.c.b16 %v842, %v840
          %v959 = vpack.c.b16 %v845, %v843
          %v960 = vpack.c.b16 %v846, %v844
          %v961 = vpack.c.b16 %v849, %v847
          %v962 = vpack.c.b16 %v850, %v848
          %v963 = vpack.c.b16 %v853, %v851
          %v964 = vpack.c.b16 %v854, %v852
          %v965 = vpack.c.b16 %v857, %v855
          %v966 = vpack.c.b16 %v858, %v856
          %v967 = vpack.c.b16 %v861, %v859
          %v968 = vpack.c.b16 %v862, %v860
          %v969 = vpack.c.b16 %v865, %v863
          %v970 = vpack.c.b16 %v866, %v864
          %v971 = vpack.c.b16 %v869, %v867
          %v972 = vpack.c.b16 %v870, %v868
          %v973 = vpack.c.b16 %v873, %v871
          %v974 = vpack.c.b16 %v874, %v872
          %v975 = vpack.c.b16 %v877, %v875
          %v976 = vpack.c.b16 %v878, %v876
          %vm1075 = vcmask 130048
          %v1077 = vsel %vm1075, %v539, 0
          %v1080 = vsel %vm1075, %v546, 0
          %v1083 = vsel %vm1075, %v553, 0
          %v1086 = vsel %vm1075, %v560, 0
          %1088 = vmatprep.subr.bf16.mxu0 %v880
          %1089 = vmatpush1.bf16.msra.mxu0 %v879
          %1090 = vmatprep.subr.bf16.mxu0 %v882
          %1091 = vmatpush1.bf16.msra.mxu0 %v881
          %1092 = vmatprep.subr.bf16.mxu0 %v884
          %1093 = vmatpush1.bf16.msra.mxu0 %v883
          %1094 = vmatprep.subr.bf16.mxu0 %v886
          %1095 = vmatpush1.bf16.msra.mxu0 %v885
          %1096 = vmatprep.subr.bf16.mxu0 %v888
          %1097 = vmatpush1.bf16.msra.mxu0 %v887
          %1098 = vmatprep.subr.bf16.mxu0 %v890
          %1099 = vmatpush1.bf16.msra.mxu0 %v889
          %1100 = vmatprep.subr.bf16.mxu0 %v892
          %1101 = vmatpush1.bf16.msra.mxu0 %v891
          %1102 = vmatprep.subr.bf16.mxu0 %v894
          %1103 = vmatpush1.bf16.msra.mxu0 %v893
          %1104 = vmatprep.subr.bf16.mxu0 %v896
          %1105 = vmatpush1.bf16.msra.mxu0 %v895
          %1106 = vmatprep.subr.bf16.mxu0 %v898
          %1107 = vmatpush1.bf16.msra.mxu0 %v897
          %1108 = vmatprep.subr.bf16.mxu0 %v900
          %1109 = vmatpush1.bf16.msra.mxu0 %v899
          %1110 = vmatprep.subr.bf16.mxu0 %v902
          %1111 = vmatpush1.bf16.msra.mxu0 %v901
          %1112 = vmatprep.subr.bf16.mxu0 %v904
          %1113 = vmatpush1.bf16.msra.mxu0 %v903
          %1114 = vmatprep.subr.bf16.mxu0 %v906
          %1115 = vmatpush1.bf16.msra.mxu0 %v905
          %1116 = vmatprep.subr.bf16.mxu0 %v908
          %1117 = vmatpush1.bf16.msra.mxu0 %v907
          %1118 = vmatprep.subr.bf16.mxu0 %v910
          %1119 = vmatpush1.bf16.msra.mxu0 %v909
          %1120 = vmatprep.mubr.bf16.mxu0 %v534
          %1121 = vmatmul.mubr.bf16.gmra.mrb[0].mxu0 %v533
          %v1122 = vpop.f32.mrb[0].mxu0
          %v1123 = vadd.f32 0.0, %v1122
          %v1124 = vpop.f32.mrb[0].mxu0
          %v1125 = vadd.f32 0.0, %v1124
          %v1126 = vpop.f32.mrb[0].mxu0
          %v1127 = vadd.f32 0.0, %v1126
          %v1128 = vpop.f32.mrb[0].mxu0
          %v1129 = vadd.f32 0.0, %v1128
          %1130 = vmatprep.mubr.bf16.mxu0 %v541
          %1131 = vmatmul.mubr.bf16.gmra.mrb[0].mxu0 %v540
          %v1132 = vpop.f32.mrb[0].mxu0
          %v1133 = vadd.f32 0.0, %v1132
          %v1134 = vpop.f32.mrb[0].mxu0
          %v1135 = vadd.f32 0.0, %v1134
          %v1136 = vpop.f32.mrb[0].mxu0
          %v1137 = vadd.f32 0.0, %v1136
          %v1138 = vpop.f32.mrb[0].mxu0
          %v1139 = vadd.f32 0.0, %v1138
          %1140 = vmatprep.mubr.bf16.mxu0 %v548
          %1141 = vmatmul.mubr.bf16.gmra.mrb[0].mxu0 %v547
          %v1142 = vpop.f32.mrb[0].mxu0
          %v1143 = vadd.f32 0.0, %v1142
          %v1144 = vpop.f32.mrb[0].mxu0
          %v1145 = vadd.f32 0.0, %v1144
          %v1146 = vpop.f32.mrb[0].mxu0
          %v1147 = vadd.f32 0.0, %v1146
          %v1148 = vpop.f32.mrb[0].mxu0
          %v1149 = vadd.f32 0.0, %v1148
          %1150 = vmatprep.mubr.bf16.mxu0 %v555
          %1151 = vmatmul.mubr.bf16.gmra.mrb[0].mxu0 %v554
          %v1152 = vpop.f32.mrb[0].mxu0
          %v1153 = vadd.f32 0.0, %v1152
          %v1154 = vpop.f32.mrb[0].mxu0
          %v1155 = vadd.f32 0.0, %v1154
          %v1156 = vpop.f32.mrb[0].mxu0
          %v1157 = vadd.f32 0.0, %v1156
          %v1158 = vpop.f32.mrb[0].mxu0
          %v1159 = vadd.f32 0.0, %v1158
          %1160 = vdwg.mxu0
          %1161 = vmatprep.subr.bf16.mxu0 %v912
          %1162 = vmatpush1.bf16.msra.mxu0 %v911
          %1163 = vmatprep.subr.bf16.mxu0 %v914
          %1164 = vmatpush1.bf16.msra.mxu0 %v913
          %1165 = vmatprep.subr.bf16.mxu0 %v916
          %1166 = vmatpush1.bf16.msra.mxu0 %v915
          %1167 = vmatprep.subr.bf16.mxu0 %v918
          %1168 = vmatpush1.bf16.msra.mxu0 %v917
          %1169 = vmatprep.subr.bf16.mxu0 %v920
          %1170 = vmatpush1.bf16.msra.mxu0 %v919
          %1171 = vmatprep.subr.bf16.mxu0 %v922
          %1172 = vmatpush1.bf16.msra.mxu0 %v921
          %1173 = vmatprep.subr.bf16.mxu0 %v924
          %1174 = vmatpush1.bf16.msra.mxu0 %v923
          %1175 = vmatprep.subr.bf16.mxu0 %v926
          %1176 = vmatpush1.bf16.msra.mxu0 %v925
          %1177 = vmatprep.subr.bf16.mxu0 %v928
          %1178 = vmatpush1.bf16.msra.mxu0 %v927
          %1179 = vmatprep.subr.bf16.mxu0 %v930
          %1180 = vmatpush1.bf16.msra.mxu0 %v929
          %1181 = vmatprep.subr.bf16.mxu0 %v932
          %1182 = vmatpush1.bf16.msra.mxu0 %v931
          %1183 = vmatprep.subr.bf16.mxu0 %v934
          %1184 = vmatpush1.bf16.msra.mxu0 %v933
          %1185 = vmatprep.subr.bf16.mxu0 %v936
          %1186 = vmatpush1.bf16.msra.mxu0 %v935
          %1187 = vmatprep.subr.bf16.mxu0 %v938
          %1188 = vmatpush1.bf16.msra.mxu0 %v937
          %1189 = vmatprep.subr.bf16.mxu0 %v940
          %1190 = vmatpush1.bf16.msra.mxu0 %v939
          %1191 = vmatprep.subr.bf16.mxu0 %v942
          %1192 = vmatpush1.bf16.msra.mxu0 %v941
          %1193 = vmatprep.mubr.bf16.mxu0 %v536
          %1194 = vmatmul.mubr.bf16.gmra.mrb[0].mxu0 %v535
          %v1195 = vpop.f32.mrb[0].mxu0
          %v1196 = vadd.f32 %v1123, %v1195
          %v1197 = vpop.f32.mrb[0].mxu0
          %v1198 = vadd.f32 %v1125, %v1197
          %v1199 = vpop.f32.mrb[0].mxu0
          %v1200 = vadd.f32 %v1127, %v1199
          %v1201 = vpop.f32.mrb[0].mxu0
          %v1202 = vadd.f32 %v1129, %v1201
          %1203 = vmatprep.mubr.bf16.mxu0 %v543
          %1204 = vmatmul.mubr.bf16.gmra.mrb[0].mxu0 %v542
          %v1205 = vpop.f32.mrb[0].mxu0
          %v1206 = vadd.f32 %v1133, %v1205
          %v1207 = vpop.f32.mrb[0].mxu0
          %v1208 = vadd.f32 %v1135, %v1207
          %v1209 = vpop.f32.mrb[0].mxu0
          %v1210 = vadd.f32 %v1137, %v1209
          %v1211 = vpop.f32.mrb[0].mxu0
          %v1212 = vadd.f32 %v1139, %v1211
          %1213 = vmatprep.mubr.bf16.mxu0 %v550
          %1214 = vmatmul.mubr.bf16.gmra.mrb[0].mxu0 %v549
          %v1215 = vpop.f32.mrb[0].mxu0
          %v1216 = vadd.f32 %v1143, %v1215
          %v1217 = vpop.f32.mrb[0].mxu0
          %v1218 = vadd.f32 %v1145, %v1217
          %v1219 = vpop.f32.mrb[0].mxu0
          %v1220 = vadd.f32 %v1147, %v1219
          %v1221 = vpop.f32.mrb[0].mxu0
          %v1222 = vadd.f32 %v1149, %v1221
          %1223 = vmatprep.mubr.bf16.mxu0 %v557
          %1224 = vmatmul.mubr.bf16.gmra.mrb[0].mxu0 %v556
          %v1225 = vpop.f32.mrb[0].mxu0
          %v1226 = vadd.f32 %v1153, %v1225
          %v1227 = vpop.f32.mrb[0].mxu0
          %v1228 = vadd.f32 %v1155, %v1227
          %v1229 = vpop.f32.mrb[0].mxu0
          %v1230 = vadd.f32 %v1157, %v1229
          %v1231 = vpop.f32.mrb[0].mxu0
          %v1232 = vadd.f32 %v1159, %v1231
          %1233 = vdwg.mxu0
          %1234 = vmatprep.subr.bf16.mxu0 %v944
          %1235 = vmatpush1.bf16.msra.mxu0 %v943
          %1236 = vmatprep.subr.bf16.mxu0 %v946
          %1237 = vmatpush1.bf16.msra.mxu0 %v945
          %1238 = vmatprep.subr.bf16.mxu0 %v948
          %1239 = vmatpush1.bf16.msra.mxu0 %v947
          %1240 = vmatprep.subr.bf16.mxu0 %v950
          %1241 = vmatpush1.bf16.msra.mxu0 %v949
          %1242 = vmatprep.subr.bf16.mxu0 %v952
          %1243 = vmatpush1.bf16.msra.mxu0 %v951
          %1244 = vmatprep.subr.bf16.mxu0 %v954
          %1245 = vmatpush1.bf16.msra.mxu0 %v953
          %1246 = vmatprep.subr.bf16.mxu0 %v956
          %1247 = vmatpush1.bf16.msra.mxu0 %v955
          %1248 = vmatprep.subr.bf16.mxu0 %v958
          %1249 = vmatpush1.bf16.msra.mxu0 %v957
          %1250 = vmatprep.subr.bf16.mxu0 %v960
          %1251 = vmatpush1.bf16.msra.mxu0 %v959
          %1252 = vmatprep.subr.bf16.mxu0 %v962
          %1253 = vmatpush1.bf16.msra.mxu0 %v961
          %1254 = vmatprep.subr.bf16.mxu0 %v964
          %1255 = vmatpush1.bf16.msra.mxu0 %v963
          %1256 = vmatprep.subr.bf16.mxu0 %v966
          %1257 = vmatpush1.bf16.msra.mxu0 %v965
          %1258 = vmatprep.subr.bf16.mxu0 %v968
          %1259 = vmatpush1.bf16.msra.mxu0 %v967
          %1260 = vmatprep.subr.bf16.mxu0 %v970
          %1261 = vmatpush1.bf16.msra.mxu0 %v969
          %1262 = vmatprep.subr.bf16.mxu0 %v972
          %1263 = vmatpush1.bf16.msra.mxu0 %v971
          %1264 = vmatprep.subr.bf16.mxu0 %v974
          %1265 = vmatpush1.bf16.msra.mxu0 %v973
          %1266 = vmatprep.mubr.bf16.mxu0 %v538
          %1267 = vmatmul.mubr.bf16.gmra.mrb[0].mxu0 %v537
          %v1268 = vpop.f32.mrb[0].mxu0
          %v1269 = vadd.f32 %v1196, %v1268
          %v1270 = vpop.f32.mrb[0].mxu0
          %v1271 = vadd.f32 %v1198, %v1270
          %v1272 = vpop.f32.mrb[0].mxu0
          %v1273 = vadd.f32 %v1200, %v1272
          %v1274 = vpop.f32.mrb[0].mxu0
          %v1275 = vadd.f32 %v1202, %v1274
          %1276 = vmatprep.mubr.bf16.mxu0 %v545
          %1277 = vmatmul.mubr.bf16.gmra.mrb[0].mxu0 %v544
          %v1278 = vpop.f32.mrb[0].mxu0
          %v1279 = vadd.f32 %v1206, %v1278
          %v1280 = vpop.f32.mrb[0].mxu0
          %v1281 = vadd.f32 %v1208, %v1280
          %v1282 = vpop.f32.mrb[0].mxu0
          %v1283 = vadd.f32 %v1210, %v1282
          %v1284 = vpop.f32.mrb[0].mxu0
          %v1285 = vadd.f32 %v1212, %v1284
          %1286 = vmatprep.mubr.bf16.mxu0 %v552
          %1287 = vmatmul.mubr.bf16.gmra.mrb[0].mxu0 %v551
          %v1288 = vpop.f32.mrb[0].mxu0
          %v1289 = vadd.f32 %v1216, %v1288
          %v1290 = vpop.f32.mrb[0].mxu0
          %v1291 = vadd.f32 %v1218, %v1290
          %v1292 = vpop.f32.mrb[0].mxu0
          %v1293 = vadd.f32 %v1220, %v1292
          %v1294 = vpop.f32.mrb[0].mxu0
          %v1295 = vadd.f32 %v1222, %v1294
          %1296 = vmatprep.mubr.bf16.mxu0 %v559
          %1297 = vmatmul.mubr.bf16.gmra.mrb[0].mxu0 %v558
          %v1298 = vpop.f32.mrb[0].mxu0
          %v1299 = vadd.f32 %v1226, %v1298
          %v1300 = vpop.f32.mrb[0].mxu0
          %v1301 = vadd.f32 %v1228, %v1300
          %v1302 = vpop.f32.mrb[0].mxu0
          %v1303 = vadd.f32 %v1230, %v1302
          %v1304 = vpop.f32.mrb[0].mxu0
          %v1305 = vadd.f32 %v1232, %v1304
          %1306 = vdwg.mxu0
          %1307 = vmatprep.subr.bf16.mxu0 %v976
          %1308 = vmatpush1.bf16.msra.mxu0 %v975
          %1309 = vmatprep.subr.bf16.mxu0 0
          %1310 = vmatpush1.bf16.msra.mxu0 0
          %1311 = vmatprep.subr.bf16.mxu0 0
          %1312 = vmatpush1.bf16.msra.mxu0 0
          %1313 = vmatprep.subr.bf16.mxu0 0
          %1314 = vmatpush1.bf16.msra.mxu0 0
          %1315 = vmatprep.subr.bf16.mxu0 0
          %1316 = vmatpush1.bf16.msra.mxu0 0
          %1317 = vmatprep.subr.bf16.mxu0 0
          %1318 = vmatpush1.bf16.msra.mxu0 0
          %1319 = vmatprep.subr.bf16.mxu0 0
          %1320 = vmatpush1.bf16.msra.mxu0 0
          %1321 = vmatprep.subr.bf16.mxu0 0
          %1322 = vmatpush1.bf16.msra.mxu0 0
          %1323 = vmatprep.subr.bf16.mxu0 0
          %1324 = vmatpush1.bf16.msra.mxu0 0
          %1325 = vmatprep.subr.bf16.mxu0 0
          %1326 = vmatpush1.bf16.msra.mxu0 0
          %1327 = vmatprep.subr.bf16.mxu0 0
          %1328 = vmatpush1.bf16.msra.mxu0 0
          %1329 = vmatprep.subr.bf16.mxu0 0
          %1330 = vmatpush1.bf16.msra.mxu0 0
          %1331 = vmatprep.subr.bf16.mxu0 0
          %1332 = vmatpush1.bf16.msra.mxu0 0
          %1333 = vmatprep.subr.bf16.mxu0 0
          %1334 = vmatpush1.bf16.msra.mxu0 0
          %1335 = vmatprep.subr.bf16.mxu0 0
          %1336 = vmatpush1.bf16.msra.mxu0 0
          %1337 = vmatprep.subr.bf16.mxu0 0
          %1338 = vmatpush1.bf16.msra.mxu0 0
          %1339 = vmatprep.mubr.bf16.mxu0 0
          %1340 = vmatmul.mubr.bf16.gmra.mrb[0].mxu0 %v1077
          %v1341 = vpop.f32.mrb[0].mxu0
          %v1342 = vadd.f32 %v1269, %v1341
          %v1343 = vpop.f32.mrb[0].mxu0
          %v1344 = vadd.f32 %v1271, %v1343
          %v1345 = vpop.f32.mrb[0].mxu0
          %v1346 = vadd.f32 %v1273, %v1345
          %v1347 = vpop.f32.mrb[0].mxu0
          %v1348 = vadd.f32 %v1275, %v1347
          %1349 = vmatprep.mubr.bf16.mxu0 0
          %1350 = vmatmul.mubr.bf16.gmra.mrb[0].mxu0 %v1080
          %v1351 = vpop.f32.mrb[0].mxu0
          %v1352 = vadd.f32 %v1279, %v1351
          %v1353 = vpop.f32.mrb[0].mxu0
          %v1354 = vadd.f32 %v1281, %v1353
          %v1355 = vpop.f32.mrb[0].mxu0
          %v1356 = vadd.f32 %v1283, %v1355
          %v1357 = vpop.f32.mrb[0].mxu0
          %v1358 = vadd.f32 %v1285, %v1357
          %1359 = vmatprep.mubr.bf16.mxu0 0
          %1360 = vmatmul.mubr.bf16.gmra.mrb[0].mxu0 %v1083
          %v1361 = vpop.f32.mrb[0].mxu0
          %v1362 = vadd.f32 %v1289, %v1361
          %v1363 = vpop.f32.mrb[0].mxu0
          %v1364 = vadd.f32 %v1291, %v1363
          %v1365 = vpop.f32.mrb[0].mxu0
          %v1366 = vadd.f32 %v1293, %v1365
          %v1367 = vpop.f32.mrb[0].mxu0
          %v1368 = vadd.f32 %v1295, %v1367
          %1369 = vmatprep.mubr.bf16.mxu0 0
          %1370 = vmatmul.mubr.bf16.gmra.mrb[0].mxu0 %v1086
          %v1371 = vpop.f32.mrb[0].mxu0
          %v1372 = vadd.f32 %v1299, %v1371
          %v1373 = vpop.f32.mrb[0].mxu0
          %v1374 = vadd.f32 %v1301, %v1373
          %v1375 = vpop.f32.mrb[0].mxu0
          %v1376 = vadd.f32 %v1303, %v1375
          %v1377 = vpop.f32.mrb[0].mxu0
          %v1378 = vadd.f32 %v1305, %v1377
          %1379 = vdwg.mxu0
          %v1380 = vpack.c.bf16 %v1346, %v1342
          %v1381 = vpack.c.bf16 %v1348, %v1344
          %v1382 = vpack.c.bf16 %v1356, %v1352
          %v1383 = vpack.c.bf16 %v1358, %v1354
          %v1384 = vpack.c.bf16 %v1366, %v1362
          %v1385 = vpack.c.bf16 %v1368, %v1364
          %v1386 = vpack.c.bf16 %v1376, %v1372
          %v1387 = vpack.c.bf16 %v1378, %v1374
          %s1388 = smul.u32 %s24, 8
          %s1389 = smul.addr %s1388, 8
          %s1390 = scalar_lea.vmem [#allocation2], %s1389
          %1391 = vst [vmem:[%s1390] sm:$0xff] %v1380
          %1392 = vst [vmem:[%s1390 + $0x8] sm:$0xff] %v1381
          %1393 = vst [vmem:[%s1390 + $0x10] sm:$0xff] %v1382
          %1394 = vst [vmem:[%s1390 + $0x18] sm:$0xff] %v1383
          %1395 = vst [vmem:[%s1390 + $0x20] sm:$0xff] %v1384
          %1396 = vst [vmem:[%s1390 + $0x28] sm:$0xff] %v1385
          %1397 = vst [vmem:[%s1390 + $0x30] sm:$0xff] %v1386
          %1398 = vst [vmem:[%s1390 + $0x38] sm:$0xff] %v1387
          %v1399 = vunpack.c.l.bf16 %v1380
          %v1400 = vunpack.c.l.bf16 %v1381
          %v1401 = vunpack.c.h.bf16 %v1380
          %v1402 = vunpack.c.h.bf16 %v1381
          %v1403 = vunpack.c.l.bf16 %v1382
          %v1404 = vunpack.c.l.bf16 %v1383
          %v1405 = vunpack.c.h.bf16 %v1382
          %v1406 = vunpack.c.h.bf16 %v1383
          %v1407 = vunpack.c.l.bf16 %v1384
          %v1408 = vunpack.c.l.bf16 %v1385
          %v1409 = vunpack.c.h.bf16 %v1384
          %v1410 = vunpack.c.h.bf16 %v1385
          %v1411 = vunpack.c.l.bf16 %v1386
          %v1412 = vunpack.c.l.bf16 %v1387
          %v1413 = vunpack.c.h.bf16 %v1386
          %v1414 = vunpack.c.h.bf16 %v1387
          %v1415 = vmul.f32 %v1399, %v297
          %v1416 = vmul.f32 %v1400, %v297
          %v1417 = vmul.f32 %v1401, %v298
          %v1418 = vmul.f32 %v1402, %v298
          %v1419 = vmul.f32 %v1403, %v299
          %v1420 = vmul.f32 %v1404, %v299
          %v1421 = vmul.f32 %v1405, %v300
          %v1422 = vmul.f32 %v1406, %v300
          %v1423 = vmul.f32 %v1407, %v301
          %v1424 = vmul.f32 %v1408, %v301
          %v1425 = vmul.f32 %v1409, %v302
          %v1426 = vmul.f32 %v1410, %v302
          %v1427 = vmul.f32 %v1411, %v303
          %v1428 = vmul.f32 %v1412, %v303
          %v1429 = vmul.f32 %v1413, %v304
          %v1430 = vmul.f32 %v1414, %v304
          %v1431 = vld [vmem:[#allocation4] ss:$8 sm:$0x3]
          %v1432 = vadd.f32 %v1415, %v1417
          %v1433 = vadd.f32 %v1432, %v1419
          %v1434 = vadd.f32 %v1433, %v1421
          %v1435 = vadd.f32 %v1434, %v1423
          %v1436 = vadd.f32 %v1435, %v1425
          %v1437 = vadd.f32 %v1436, %v1427
          %v1438 = vadd.f32 %v1437, %v1429
          %v1439 = vrot.slane %v1438, 4
          %v1440 = vadd.f32 %v1438, %v1439
          %v1441 = vrot.slane %v1440, 2
          %v1442 = vadd.f32 %v1440, %v1441
          %v1443 = vrot.slane %v1442, 1
          %v1444 = vadd.f32 %v1442, %v1443
          %v1445 = vadd.f32 %v1416, %v1418
          %v1446 = vadd.f32 %v1445, %v1420
          %v1447 = vadd.f32 %v1446, %v1422
          %v1448 = vadd.f32 %v1447, %v1424
          %v1449 = vadd.f32 %v1448, %v1426
          %v1450 = vadd.f32 %v1449, %v1428
          %v1451 = vadd.f32 %v1450, %v1430
          %v1452 = vrot.slane %v1451, 4
          %v1453 = vadd.f32 %v1451, %v1452
          %v1454 = vrot.slane %v1453, 2
          %v1455 = vadd.f32 %v1453, %v1454
          %v1456 = vrot.slane %v1455, 1
          %v1457 = vadd.f32 %v1455, %v1456
          %v1460 = vcombine.low %v1444, %v1457
          %v1462 = vunpack.c.l.s4 1966171168
          %v1463 = vunpack.c.0.s8 %v1462
          %v1464 = vlaneseq
          %v1465 = vshrl.u32 %v1464, 7
          %v1466 = vsub.s32 %v1463, %v1465
          %v1467 = vrot.slane %v1460, %v1466
          %v1469 = vunpack.c.l.s4 1966171168
          %v1470 = vunpack.c.0.s8 %v1469
          %v1471 = vlaneseq
          %v1472 = vshrl.u32 %v1471, 7
          %v1473 = vsub.s32 %v1470, %v1472
          %v1474 = vrot.slane %v1467, %v1473
          %v1476 = vadd.f32 %v1431, %v1474
          %v1477 = vlaneseq
          %vm1478 = vcmp.ge.s32.totalorder %v1477, 0
          %vm1479 = vcmp.lt.s32.totalorder %v1477, 256
          %vm1480 = vmand %vm1478, %vm1479
          %1481 = vst.msk [vmem:[#allocation4] ss:$8 sm:$0x3] %vm1480, %v1476
          %1482 = vst.msk [vmem:[#allocation4] ss:$8 sm:$0x0] %vm1480, %v1476
          %s1483 = scalar_lea.vmem [#allocation4], 1
          %v1484 = vld [vmem:[%s1483] ss:$8 sm:$0x3]
          %v1485 = vmul.f32 %v1415, %v1415
          %v1486 = vmul.f32 %v1416, %v1416
          %v1487 = vmul.f32 %v1417, %v1417
          %v1488 = vmul.f32 %v1418, %v1418
          %v1489 = vmul.f32 %v1419, %v1419
          %v1490 = vmul.f32 %v1420, %v1420
          %v1491 = vmul.f32 %v1421, %v1421
          %v1492 = vmul.f32 %v1422, %v1422
          %v1493 = vmul.f32 %v1423, %v1423
          %v1494 = vmul.f32 %v1424, %v1424
          %v1495 = vmul.f32 %v1425, %v1425
          %v1496 = vmul.f32 %v1426, %v1426
          %v1497 = vmul.f32 %v1427, %v1427
          %v1498 = vmul.f32 %v1428, %v1428
          %v1499 = vmul.f32 %v1429, %v1429
          %v1500 = vmul.f32 %v1430, %v1430
          %v1501 = vadd.f32 %v1485, %v1487
          %v1502 = vadd.f32 %v1501, %v1489
          %v1503 = vadd.f32 %v1502, %v1491
          %v1504 = vadd.f32 %v1503, %v1493
          %v1505 = vadd.f32 %v1504, %v1495
          %v1506 = vadd.f32 %v1505, %v1497
          %v1507 = vadd.f32 %v1506, %v1499
          %v1508 = vrot.slane %v1507, 4
          %v1509 = vadd.f32 %v1507, %v1508
          %v1510 = vrot.slane %v1509, 2
          %v1511 = vadd.f32 %v1509, %v1510
          %v1512 = vrot.slane %v1511, 1
          %v1513 = vadd.f32 %v1511, %v1512
          %v1514 = vadd.f32 %v1486, %v1488
          %v1515 = vadd.f32 %v1514, %v1490
          %v1516 = vadd.f32 %v1515, %v1492
          %v1517 = vadd.f32 %v1516, %v1494
          %v1518 = vadd.f32 %v1517, %v1496
          %v1519 = vadd.f32 %v1518, %v1498
          %v1520 = vadd.f32 %v1519, %v1500
          %v1521 = vrot.slane %v1520, 4
          %v1522 = vadd.f32 %v1520, %v1521
          %v1523 = vrot.slane %v1522, 2
          %v1524 = vadd.f32 %v1522, %v1523
          %v1525 = vrot.slane %v1524, 1
          %v1526 = vadd.f32 %v1524, %v1525
          %v1529 = vcombine.low %v1513, %v1526
          %v1531 = vunpack.c.l.s4 1966171168
          %v1532 = vunpack.c.0.s8 %v1531
          %v1533 = vlaneseq
          %v1534 = vshrl.u32 %v1533, 7
          %v1535 = vsub.s32 %v1532, %v1534
          %v1536 = vrot.slane %v1529, %v1535
          %v1538 = vunpack.c.l.s4 1966171168
          %v1539 = vunpack.c.0.s8 %v1538
          %v1540 = vlaneseq
          %v1541 = vshrl.u32 %v1540, 7
          %v1542 = vsub.s32 %v1539, %v1541
          %v1543 = vrot.slane %v1536, %v1542
          %v1545 = vadd.f32 %v1484, %v1543
          %1546 = vst.msk [vmem:[%s1483] ss:$8 sm:$0x3] %vm1480, %v1545
          %1547 = vst.msk [vmem:[%s1483] ss:$8 sm:$0x0] %vm1480, %v1545
          %p1548 = scmp.eq.s32.totalorder %s24, 3
          // Predicated region
          $region49: #{tpu_custom_call.1} parent=43 // pred_check
            %p1549 = pneg %p1548
          $region50: #{tpu_custom_call.1} parent=43 // pred_check_branch
            %1551 = sbr.rel (%p1549) target = $region52
          $region51: #{tpu_custom_call.1} parent=43 // pred_region
            %v1552 = vld [vmem:[%s4] ss:$8 sm:$0x3]
            %s1553 = scalar_lea.vmem %s4, 1
            %v1554 = vld [vmem:[%s1553] ss:$8 sm:$0x3]
            %v1555 = vld [vmem:[#allocation4] ss:$8 sm:$0x3]
            %v1556 = vmul.f32 %v1555, 0.005
            %v1557 = vld [vmem:[%s1483] ss:$8 sm:$0x3]
            %v1558 = vmul.f32 %v1557, 0.005
            %v1559 = vmul.f32 %v1556, %v1556
            %v1560 = vsub.f32 %v1558, %v1559
            %v1561 = vmax.f32 %v1560, 0.0
            %v1562 = vadd.f32 %v1561, 1e-05
            %v1563 = vrsqrt.pop %v1562
            %v1564 = vmul.f32 %v1552, %v1563
            %s1565 = scalar_lea.vmem [#allocation4], 2
            %1566 = vst.msk [vmem:[%s1565] ss:$8 sm:$0x3] %vm1480, %v1564
            %1567 = vst.msk [vmem:[%s1565] ss:$8 sm:$0x0] %vm1480, %v1564
            %v1568 = vmul.f32 %v1556, %v1564
            %v1569 = vsub.f32 %v1554, %v1568
            %s1570 = scalar_lea.vmem [#allocation4], 3
            %1571 = vst.msk [vmem:[%s1570] ss:$8 sm:$0x3] %vm1480, %v1569
            %1572 = vst.msk [vmem:[%s1570] ss:$8 sm:$0x0] %vm1480, %v1569
          $region52: #{tpu_custom_call.1} parent=43 // pred_fallthru
            _
        $region44: #{tpu_custom_call.1} parent=39 // pred_fallthru
          _
        %p1573 = scmp.eq.s32.totalorder %s23, 1
        // Predicated region
        $region53: #{tpu_custom_call.1} parent=39 // pred_check
          %p1574 = pneg %p1573
        $region54: #{tpu_custom_call.1} parent=39 // pred_check_branch
          %1576 = sbr.rel (%p1574) target = $region56
        $region55: #{tpu_custom_call.1} parent=39 // pred_region
          %p1577 = scmp.eq.s32.totalorder %s24, 0
          // Predicated region
          $region57: #{tpu_custom_call.1} parent=55 // pred_check
            %p1578 = pneg %p1577
          $region58: #{tpu_custom_call.1} parent=55 // pred_check_branch
            %1580 = sbr.rel (%p1578) target = $region60
          $region59: #{tpu_custom_call.1} parent=55 // pred_region
            %1581 = vst [vmem:[#allocation4] sm:$0x30] 0.0
            %1582 = vst [vmem:[#allocation4 + $0x8] sm:$0x30] 0.0
          $region60: #{tpu_custom_call.1} parent=55 // pred_fallthru
            _
          %s1583 = scalar_lea.vmem [#allocation4], 2
          %v1584 = vld [vmem:[%s1583] ss:$8 sm:$0x3]
          %s1585 = scalar_lea.vmem [#allocation4], 3
          %v1586 = vld [vmem:[%s1585] ss:$8 sm:$0x3]
          %s1587 = smul.u32 %s24, 8
          %s1588 = smul.addr %s1587, 8
          %s1589 = scalar_lea.vmem [#allocation2], %s1588
          %v1590 = vld [vmem:[%s1589] sm:$0xff]
          %v1591 = vld [vmem:[%s1589 + $0x8] sm:$0xff]
          %v1592 = vld [vmem:[%s1589 + $0x10] sm:$0xff]
          %v1593 = vld [vmem:[%s1589 + $0x18] sm:$0xff]
          %v1594 = vld [vmem:[%s1589 + $0x20] sm:$0xff]
          %v1595 = vld [vmem:[%s1589 + $0x28] sm:$0xff]
          %v1596 = vld [vmem:[%s1589 + $0x30] sm:$0xff]
          %v1597 = vld [vmem:[%s1589 + $0x38] sm:$0xff]
          %v1598 = vunpack.c.l.bf16 %v1590
          %v1599 = vunpack.c.l.bf16 %v1591
          %v1600 = vunpack.c.h.bf16 %v1590
          %v1601 = vunpack.c.h.bf16 %v1591
          %v1602 = vunpack.c.l.bf16 %v1592
          %v1603 = vunpack.c.l.bf16 %v1593
          %v1604 = vunpack.c.h.bf16 %v1592
          %v1605 = vunpack.c.h.bf16 %v1593
          %v1606 = vunpack.c.l.bf16 %v1594
          %v1607 = vunpack.c.l.bf16 %v1595
          %v1608 = vunpack.c.h.bf16 %v1594
          %v1609 = vunpack.c.h.bf16 %v1595
          %v1610 = vunpack.c.l.bf16 %v1596
          %v1611 = vunpack.c.l.bf16 %v1597
          %v1612 = vunpack.c.h.bf16 %v1596
          %v1613 = vunpack.c.h.bf16 %v1597
          %v1615 = vlaneseq
          %v1616 = vshrl.u32 %v1615, 7
          %v1617 = vsub.s32 0, %v1616
          %v1618 = vrot.slane %v1584, %v1617
          %v1619 = vlaneseq
          %v1620 = vshrl.u32 %v1619, 7
          %v1621 = vsub.s32 1, %v1620
          %v1622 = vrot.slane %v1584, %v1621
          %v1625 = vmul.f32 %v1598, %v1618
          %v1626 = vmul.f32 %v1599, %v1622
          %v1627 = vmul.f32 %v1600, %v1618
          %v1628 = vmul.f32 %v1601, %v1622
          %v1629 = vmul.f32 %v1602, %v1618
          %v1630 = vmul.f32 %v1603, %v1622
          %v1631 = vmul.f32 %v1604, %v1618
          %v1632 = vmul.f32 %v1605, %v1622
          %v1633 = vmul.f32 %v1606, %v1618
          %v1634 = vmul.f32 %v1607, %v1622
          %v1635 = vmul.f32 %v1608, %v1618
          %v1636 = vmul.f32 %v1609, %v1622
          %v1637 = vmul.f32 %v1610, %v1618
          %v1638 = vmul.f32 %v1611, %v1622
          %v1639 = vmul.f32 %v1612, %v1618
          %v1640 = vmul.f32 %v1613, %v1622
          %v1642 = vlaneseq
          %v1643 = vshrl.u32 %v1642, 7
          %v1644 = vsub.s32 0, %v1643
          %v1645 = vrot.slane %v1586, %v1644
          %v1646 = vlaneseq
          %v1647 = vshrl.u32 %v1646, 7
          %v1648 = vsub.s32 1, %v1647
          %v1649 = vrot.slane %v1586, %v1648
          %v1652 = vadd.f32 %v1625, %v1645
          %v1653 = vadd.f32 %v1626, %v1649
          %v1654 = vadd.f32 %v1627, %v1645
          %v1655 = vadd.f32 %v1628, %v1649
          %v1656 = vadd.f32 %v1629, %v1645
          %v1657 = vadd.f32 %v1630, %v1649
          %v1658 = vadd.f32 %v1631, %v1645
          %v1659 = vadd.f32 %v1632, %v1649
          %v1660 = vadd.f32 %v1633, %v1645
          %v1661 = vadd.f32 %v1634, %v1649
          %v1662 = vadd.f32 %v1635, %v1645
          %v1663 = vadd.f32 %v1636, %v1649
          %v1664 = vadd.f32 %v1637, %v1645
          %v1665 = vadd.f32 %v1638, %v1649
          %v1666 = vadd.f32 %v1639, %v1645
          %v1667 = vadd.f32 %v1640, %v1649
          %v1668 = vmax.f32 %v1652, 0.0
          %v1669 = vmax.f32 %v1653, 0.0
          %v1670 = vmax.f32 %v1654, 0.0
          %v1671 = vmax.f32 %v1655, 0.0
          %v1672 = vmax.f32 %v1656, 0.0
          %v1673 = vmax.f32 %v1657, 0.0
          %v1674 = vmax.f32 %v1658, 0.0
          %v1675 = vmax.f32 %v1659, 0.0
          %v1676 = vmax.f32 %v1660, 0.0
          %v1677 = vmax.f32 %v1661, 0.0
          %v1678 = vmax.f32 %v1662, 0.0
          %v1679 = vmax.f32 %v1663, 0.0
          %v1680 = vmax.f32 %v1664, 0.0
          %v1681 = vmax.f32 %v1665, 0.0
          %v1682 = vmax.f32 %v1666, 0.0
          %v1683 = vmax.f32 %v1667, 0.0
          %v1684 = vpack.c.bf16 %v1670, %v1668
          %v1685 = vpack.c.bf16 %v1671, %v1669
          %v1686 = vpack.c.bf16 %v1674, %v1672
          %v1687 = vpack.c.bf16 %v1675, %v1673
          %v1688 = vpack.c.bf16 %v1678, %v1676
          %v1689 = vpack.c.bf16 %v1679, %v1677
          %v1690 = vpack.c.bf16 %v1682, %v1680
          %v1691 = vpack.c.bf16 %v1683, %v1681
          %v1692 = vld [vmem:[%s2] sm:$0xff]
          %v1693 = vld [vmem:[%s2 + $0x8] sm:$0xff]
          %v1694 = vld [vmem:[%s2 + $0x10] sm:$0xff]
          %v1695 = vld [vmem:[%s2 + $0x18] sm:$0xff]
          %v1696 = vld [vmem:[%s2 + $0x20] sm:$0xff]
          %v1697 = vld [vmem:[%s2 + $0x28] sm:$0xff]
          %v1698 = vld [vmem:[%s2 + $0x30] sm:$0xff]
          %v1699 = vld [vmem:[%s2 + $0x38] sm:$0xff]
          %v1700 = vld [vmem:[%s2 + $0x40] sm:$0xff]
          %v1701 = vld [vmem:[%s2 + $0x48] sm:$0xff]
          %v1702 = vld [vmem:[%s2 + $0x50] sm:$0xff]
          %v1703 = vld [vmem:[%s2 + $0x58] sm:$0xff]
          %v1704 = vld [vmem:[%s2 + $0x60] sm:$0xff]
          %v1705 = vld [vmem:[%s2 + $0x68] sm:$0xff]
          %v1706 = vld [vmem:[%s2 + $0x70] sm:$0xff]
          %v1707 = vld [vmem:[%s2 + $0x78] sm:$0xff]
          %v1708 = vld [vmem:[%s2 + $0x80] sm:$0xff]
          %v1709 = vld [vmem:[%s2 + $0x88] sm:$0xff]
          %v1710 = vld [vmem:[%s2 + $0x90] sm:$0xff]
          %v1711 = vld [vmem:[%s2 + $0x98] sm:$0xff]
          %v1712 = vld [vmem:[%s2 + $0xa0] sm:$0xff]
          %v1713 = vld [vmem:[%s2 + $0xa8] sm:$0xff]
          %v1714 = vld [vmem:[%s2 + $0xb0] sm:$0xff]
          %v1715 = vld [vmem:[%s2 + $0xb8] sm:$0xff]
          %v1716 = vld [vmem:[%s2 + $0xc0] sm:$0xff]
          %v1717 = vld [vmem:[%s2 + $0xc8] sm:$0xff]
          %v1718 = vld [vmem:[%s2 + $0xd0] sm:$0xff]
          %v1719 = vld [vmem:[%s2 + $0xd8] sm:$0xff]
          %v1720 = vld [vmem:[%s2 + $0xe0] sm:$0xff]
          %v1721 = vld [vmem:[%s2 + $0xe8] sm:$0xff]
          %v1722 = vld [vmem:[%s2 + $0xf0] sm:$0xff]
          %v1723 = vld [vmem:[%s2 + $0xf8] sm:$0xff]
          %v1756 = vunpack.c.l.b16 %v1692
          %v1757 = vunpack.c.h.b16 %v1692
          %v1758 = vunpack.c.l.b16 %v1693
          %v1759 = vunpack.c.h.b16 %v1693
          %v1760 = vunpack.c.l.b16 %v1694
          %v1761 = vunpack.c.h.b16 %v1694
          %v1762 = vunpack.c.l.b16 %v1695
          %v1763 = vunpack.c.h.b16 %v1695
          %v1764 = vunpack.c.l.b16 %v1696
          %v1765 = vunpack.c.h.b16 %v1696
          %v1766 = vunpack.c.l.b16 %v1697
          %v1767 = vunpack.c.h.b16 %v1697
          %v1768 = vunpack.c.l.b16 %v1698
          %v1769 = vunpack.c.h.b16 %v1698
          %v1770 = vunpack.c.l.b16 %v1699
          %v1771 = vunpack.c.h.b16 %v1699
          %v1772 = vunpack.c.l.b16 %v1700
          %v1773 = vunpack.c.h.b16 %v1700
          %v1774 = vunpack.c.l.b16 %v1701
          %v1775 = vunpack.c.h.b16 %v1701
          %v1776 = vunpack.c.l.b16 %v1702
          %v1777 = vunpack.c.h.b16 %v1702
          %v1778 = vunpack.c.l.b16 %v1703
          %v1779 = vunpack.c.h.b16 %v1703
          %v1780 = vunpack.c.l.b16 %v1704
          %v1781 = vunpack.c.h.b16 %v1704
          %v1782 = vunpack.c.l.b16 %v1705
          %v1783 = vunpack.c.h.b16 %v1705
          %v1784 = vunpack.c.l.b16 %v1706
          %v1785 = vunpack.c.h.b16 %v1706
          %v1786 = vunpack.c.l.b16 %v1707
          %v1787 = vunpack.c.h.b16 %v1707
          %v1788 = vunpack.c.l.b16 %v1708
          %v1789 = vunpack.c.h.b16 %v1708
          %v1790 = vunpack.c.l.b16 %v1709
          %v1791 = vunpack.c.h.b16 %v1709
          %v1792 = vunpack.c.l.b16 %v1710
          %v1793 = vunpack.c.h.b16 %v1710
          %v1794 = vunpack.c.l.b16 %v1711
          %v1795 = vunpack.c.h.b16 %v1711
          %v1796 = vunpack.c.l.b16 %v1712
          %v1797 = vunpack.c.h.b16 %v1712
          %v1798 = vunpack.c.l.b16 %v1713
          %v1799 = vunpack.c.h.b16 %v1713
          %v1800 = vunpack.c.l.b16 %v1714
          %v1801 = vunpack.c.h.b16 %v1714
          %v1802 = vunpack.c.l.b16 %v1715
          %v1803 = vunpack.c.h.b16 %v1715
          %v1804 = vunpack.c.l.b16 %v1716
          %v1805 = vunpack.c.h.b16 %v1716
          %v1806 = vunpack.c.l.b16 %v1717
          %v1807 = vunpack.c.h.b16 %v1717
          %v1808 = vunpack.c.l.b16 %v1718
          %v1809 = vunpack.c.h.b16 %v1718
          %v1810 = vunpack.c.l.b16 %v1719
          %v1811 = vunpack.c.h.b16 %v1719
          %v1812 = vunpack.c.l.b16 %v1720
          %v1813 = vunpack.c.h.b16 %v1720
          %v1814 = vunpack.c.l.b16 %v1721
          %v1815 = vunpack.c.h.b16 %v1721
          %v1816 = vunpack.c.l.b16 %v1722
          %v1817 = vunpack.c.h.b16 %v1722
          %v1818 = vunpack.c.l.b16 %v1723
          %v1819 = vunpack.c.h.b16 %v1723
          %v1820 = vpack.c.b16 %v1758, %v1756
          %v1821 = vpack.c.b16 %v1759, %v1757
          %v1822 = vpack.c.b16 %v1762, %v1760
          %v1823 = vpack.c.b16 %v1763, %v1761
          %v1824 = vpack.c.b16 %v1766, %v1764
          %v1825 = vpack.c.b16 %v1767, %v1765
          %v1826 = vpack.c.b16 %v1770, %v1768
          %v1827 = vpack.c.b16 %v1771, %v1769
          %v1828 = vpack.c.b16 %v1774, %v1772
          %v1829 = vpack.c.b16 %v1775, %v1773
          %v1830 = vpack.c.b16 %v1778, %v1776
          %v1831 = vpack.c.b16 %v1779, %v1777
          %v1832 = vpack.c.b16 %v1782, %v1780
          %v1833 = vpack.c.b16 %v1783, %v1781
          %v1834 = vpack.c.b16 %v1786, %v1784
          %v1835 = vpack.c.b16 %v1787, %v1785
          %v1836 = vpack.c.b16 %v1790, %v1788
          %v1837 = vpack.c.b16 %v1791, %v1789
          %v1838 = vpack.c.b16 %v1794, %v1792
          %v1839 = vpack.c.b16 %v1795, %v1793
          %v1840 = vpack.c.b16 %v1798, %v1796
          %v1841 = vpack.c.b16 %v1799, %v1797
          %v1842 = vpack.c.b16 %v1802, %v1800
          %v1843 = vpack.c.b16 %v1803, %v1801
          %v1844 = vpack.c.b16 %v1806, %v1804
          %v1845 = vpack.c.b16 %v1807, %v1805
          %v1846 = vpack.c.b16 %v1810, %v1808
          %v1847 = vpack.c.b16 %v1811, %v1809
          %v1848 = vpack.c.b16 %v1814, %v1812
          %v1849 = vpack.c.b16 %v1815, %v1813
          %v1850 = vpack.c.b16 %v1818, %v1816
          %v1851 = vpack.c.b16 %v1819, %v1817
          %1884 = vmatprep.subr.bf16.mxu0 %v1821
          %1885 = vmatpush1.bf16.msra.mxu0 %v1820
          %1886 = vmatprep.subr.bf16.mxu0 %v1823
          %1887 = vmatpush1.bf16.msra.mxu0 %v1822
          %1888 = vmatprep.subr.bf16.mxu0 %v1825
          %1889 = vmatpush1.bf16.msra.mxu0 %v1824
          %1890 = vmatprep.subr.bf16.mxu0 %v1827
          %1891 = vmatpush1.bf16.msra.mxu0 %v1826
          %1892 = vmatprep.subr.bf16.mxu0 %v1829
          %1893 = vmatpush1.bf16.msra.mxu0 %v1828
          %1894 = vmatprep.subr.bf16.mxu0 %v1831
          %1895 = vmatpush1.bf16.msra.mxu0 %v1830
          %1896 = vmatprep.subr.bf16.mxu0 %v1833
          %1897 = vmatpush1.bf16.msra.mxu0 %v1832
          %1898 = vmatprep.subr.bf16.mxu0 %v1835
          %1899 = vmatpush1.bf16.msra.mxu0 %v1834
          %1900 = vmatprep.subr.bf16.mxu0 %v1837
          %1901 = vmatpush1.bf16.msra.mxu0 %v1836
          %1902 = vmatprep.subr.bf16.mxu0 %v1839
          %1903 = vmatpush1.bf16.msra.mxu0 %v1838
          %1904 = vmatprep.subr.bf16.mxu0 %v1841
          %1905 = vmatpush1.bf16.msra.mxu0 %v1840
          %1906 = vmatprep.subr.bf16.mxu0 %v1843
          %1907 = vmatpush1.bf16.msra.mxu0 %v1842
          %1908 = vmatprep.subr.bf16.mxu0 %v1845
          %1909 = vmatpush1.bf16.msra.mxu0 %v1844
          %1910 = vmatprep.subr.bf16.mxu0 %v1847
          %1911 = vmatpush1.bf16.msra.mxu0 %v1846
          %1912 = vmatprep.subr.bf16.mxu0 %v1849
          %1913 = vmatpush1.bf16.msra.mxu0 %v1848
          %1914 = vmatprep.subr.bf16.mxu0 %v1851
          %1915 = vmatpush1.bf16.msra.mxu0 %v1850
          %1916 = vmatprep.mubr.bf16.mxu0 %v1685
          %1917 = vmatmul.mubr.bf16.gmra.mrb[0].mxu0 %v1684
          %v1918 = vpop.f32.mrb[0].mxu0
          %v1919 = vadd.f32 0.0, %v1918
          %v1920 = vpop.f32.mrb[0].mxu0
          %v1921 = vadd.f32 0.0, %v1920
          %v1922 = vpop.f32.mrb[0].mxu0
          %v1923 = vadd.f32 0.0, %v1922
          %v1924 = vpop.f32.mrb[0].mxu0
          %v1925 = vadd.f32 0.0, %v1924
          %1926 = vmatprep.mubr.bf16.mxu0 %v1687
          %1927 = vmatmul.mubr.bf16.gmra.mrb[0].mxu0 %v1686
          %v1928 = vpop.f32.mrb[0].mxu0
          %v1929 = vadd.f32 0.0, %v1928
          %v1930 = vpop.f32.mrb[0].mxu0
          %v1931 = vadd.f32 0.0, %v1930
          %v1932 = vpop.f32.mrb[0].mxu0
          %v1933 = vadd.f32 0.0, %v1932
          %v1934 = vpop.f32.mrb[0].mxu0
          %v1935 = vadd.f32 0.0, %v1934
          %1936 = vmatprep.mubr.bf16.mxu0 %v1689
          %1937 = vmatmul.mubr.bf16.gmra.mrb[0].mxu0 %v1688
          %v1938 = vpop.f32.mrb[0].mxu0
          %v1939 = vadd.f32 0.0, %v1938
          %v1940 = vpop.f32.mrb[0].mxu0
          %v1941 = vadd.f32 0.0, %v1940
          %v1942 = vpop.f32.mrb[0].mxu0
          %v1943 = vadd.f32 0.0, %v1942
          %v1944 = vpop.f32.mrb[0].mxu0
          %v1945 = vadd.f32 0.0, %v1944
          %1946 = vmatprep.mubr.bf16.mxu0 %v1691
          %1947 = vmatmul.mubr.bf16.gmra.mrb[0].mxu0 %v1690
          %v1948 = vpop.f32.mrb[0].mxu0
          %v1949 = vadd.f32 0.0, %v1948
          %v1950 = vpop.f32.mrb[0].mxu0
          %v1951 = vadd.f32 0.0, %v1950
          %v1952 = vpop.f32.mrb[0].mxu0
          %v1953 = vadd.f32 0.0, %v1952
          %v1954 = vpop.f32.mrb[0].mxu0
          %v1955 = vadd.f32 0.0, %v1954
          %1956 = vdwg.mxu0
          %v1957 = vpack.c.bf16 %v1923, %v1919
          %v1958 = vpack.c.bf16 %v1925, %v1921
          %v1959 = vpack.c.bf16 %v1933, %v1929
          %v1960 = vpack.c.bf16 %v1935, %v1931
          %v1961 = vpack.c.bf16 %v1943, %v1939
          %v1962 = vpack.c.bf16 %v1945, %v1941
          %v1963 = vpack.c.bf16 %v1953, %v1949
          %v1964 = vpack.c.bf16 %v1955, %v1951
          %s1965 = smul.addr %s1587, 8
          %s1966 = scalar_lea.vmem [#allocation3], %s1965
          %1967 = vst [vmem:[%s1966] sm:$0xff] %v1957
          %1968 = vst [vmem:[%s1966 + $0x8] sm:$0xff] %v1958
          %1969 = vst [vmem:[%s1966 + $0x10] sm:$0xff] %v1959
          %1970 = vst [vmem:[%s1966 + $0x18] sm:$0xff] %v1960
          %1971 = vst [vmem:[%s1966 + $0x20] sm:$0xff] %v1961
          %1972 = vst [vmem:[%s1966 + $0x28] sm:$0xff] %v1962
          %1973 = vst [vmem:[%s1966 + $0x30] sm:$0xff] %v1963
          %1974 = vst [vmem:[%s1966 + $0x38] sm:$0xff] %v1964
          %v1975 = vunpack.c.l.bf16 %v1957
          %v1976 = vunpack.c.l.bf16 %v1958
          %v1977 = vunpack.c.h.bf16 %v1957
          %v1978 = vunpack.c.h.bf16 %v1958
          %v1979 = vunpack.c.l.bf16 %v1959
          %v1980 = vunpack.c.l.bf16 %v1960
          %v1981 = vunpack.c.h.bf16 %v1959
          %v1982 = vunpack.c.h.bf16 %v1960
          %v1983 = vunpack.c.l.bf16 %v1961
          %v1984 = vunpack.c.l.bf16 %v1962
          %v1985 = vunpack.c.h.bf16 %v1961
          %v1986 = vunpack.c.h.bf16 %v1962
          %v1987 = vunpack.c.l.bf16 %v1963
          %v1988 = vunpack.c.l.bf16 %v1964
          %v1989 = vunpack.c.h.bf16 %v1963
          %v1990 = vunpack.c.h.bf16 %v1964
          %v1991 = vmul.f32 %v1975, %v297
          %v1992 = vmul.f32 %v1976, %v297
          %v1993 = vmul.f32 %v1977, %v298
          %v1994 = vmul.f32 %v1978, %v298
          %v1995 = vmul.f32 %v1979, %v299
          %v1996 = vmul.f32 %v1980, %v299
          %v1997 = vmul.f32 %v1981, %v300
          %v1998 = vmul.f32 %v1982, %v300
          %v1999 = vmul.f32 %v1983, %v301
          %v2000 = vmul.f32 %v1984, %v301
          %v2001 = vmul.f32 %v1985, %v302
          %v2002 = vmul.f32 %v1986, %v302
          %v2003 = vmul.f32 %v1987, %v303
          %v2004 = vmul.f32 %v1988, %v303
          %v2005 = vmul.f32 %v1989, %v304
          %v2006 = vmul.f32 %v1990, %v304
          %s2007 = scalar_lea.vmem [#allocation4], 4
          %v2008 = vld [vmem:[%s2007] ss:$8 sm:$0x3]
          %v2009 = vadd.f32 %v1991, %v1993
          %v2010 = vadd.f32 %v2009, %v1995
          %v2011 = vadd.f32 %v2010, %v1997
          %v2012 = vadd.f32 %v2011, %v1999
          %v2013 = vadd.f32 %v2012, %v2001
          %v2014 = vadd.f32 %v2013, %v2003
          %v2015 = vadd.f32 %v2014, %v2005
          %v2016 = vrot.slane %v2015, 4
          %v2017 = vadd.f32 %v2015, %v2016
          %v2018 = vrot.slane %v2017, 2
          %v2019 = vadd.f32 %v2017, %v2018
          %v2020 = vrot.slane %v2019, 1
          %v2021 = vadd.f32 %v2019, %v2020
          %v2022 = vadd.f32 %v1992, %v1994
          %v2023 = vadd.f32 %v2022, %v1996
          %v2024 = vadd.f32 %v2023, %v1998
          %v2025 = vadd.f32 %v2024, %v2000
          %v2026 = vadd.f32 %v2025, %v2002
          %v2027 = vadd.f32 %v2026, %v2004
          %v2028 = vadd.f32 %v2027, %v2006
          %v2029 = vrot.slane %v2028, 4
          %v2030 = vadd.f32 %v2028, %v2029
          %v2031 = vrot.slane %v2030, 2
          %v2032 = vadd.f32 %v2030, %v2031
          %v2033 = vrot.slane %v2032, 1
          %v2034 = vadd.f32 %v2032, %v2033
          %v2037 = vcombine.low %v2021, %v2034
          %v2039 = vunpack.c.l.s4 1966171168
          %v2040 = vunpack.c.0.s8 %v2039
          %v2041 = vlaneseq
          %v2042 = vshrl.u32 %v2041, 7
          %v2043 = vsub.s32 %v2040, %v2042
          %v2044 = vrot.slane %v2037, %v2043
          %v2046 = vunpack.c.l.s4 1966171168
          %v2047 = vunpack.c.0.s8 %v2046
          %v2048 = vlaneseq
          %v2049 = vshrl.u32 %v2048, 7
          %v2050 = vsub.s32 %v2047, %v2049
          %v2051 = vrot.slane %v2044, %v2050
          %v2053 = vadd.f32 %v2008, %v2051
          %v2054 = vlaneseq
          %vm2055 = vcmp.ge.s32.totalorder %v2054, 0
          %vm2056 = vcmp.lt.s32.totalorder %v2054, 256
          %vm2057 = vmand %vm2055, %vm2056
          %2058 = vst.msk [vmem:[%s2007] ss:$8 sm:$0x3] %vm2057, %v2053
          %2059 = vst.msk [vmem:[%s2007] ss:$8 sm:$0x0] %vm2057, %v2053
          %s2060 = scalar_lea.vmem [#allocation4], 5
          %v2061 = vld [vmem:[%s2060] ss:$8 sm:$0x3]
          %v2062 = vmul.f32 %v1991, %v1991
          %v2063 = vmul.f32 %v1992, %v1992
          %v2064 = vmul.f32 %v1993, %v1993
          %v2065 = vmul.f32 %v1994, %v1994
          %v2066 = vmul.f32 %v1995, %v1995
          %v2067 = vmul.f32 %v1996, %v1996
          %v2068 = vmul.f32 %v1997, %v1997
          %v2069 = vmul.f32 %v1998, %v1998
          %v2070 = vmul.f32 %v1999, %v1999
          %v2071 = vmul.f32 %v2000, %v2000
          %v2072 = vmul.f32 %v2001, %v2001
          %v2073 = vmul.f32 %v2002, %v2002
          %v2074 = vmul.f32 %v2003, %v2003
          %v2075 = vmul.f32 %v2004, %v2004
          %v2076 = vmul.f32 %v2005, %v2005
          %v2077 = vmul.f32 %v2006, %v2006
          %v2078 = vadd.f32 %v2062, %v2064
          %v2079 = vadd.f32 %v2078, %v2066
          %v2080 = vadd.f32 %v2079, %v2068
          %v2081 = vadd.f32 %v2080, %v2070
          %v2082 = vadd.f32 %v2081, %v2072
          %v2083 = vadd.f32 %v2082, %v2074
          %v2084 = vadd.f32 %v2083, %v2076
          %v2085 = vrot.slane %v2084, 4
          %v2086 = vadd.f32 %v2084, %v2085
          %v2087 = vrot.slane %v2086, 2
          %v2088 = vadd.f32 %v2086, %v2087
          %v2089 = vrot.slane %v2088, 1
          %v2090 = vadd.f32 %v2088, %v2089
          %v2091 = vadd.f32 %v2063, %v2065
          %v2092 = vadd.f32 %v2091, %v2067
          %v2093 = vadd.f32 %v2092, %v2069
          %v2094 = vadd.f32 %v2093, %v2071
          %v2095 = vadd.f32 %v2094, %v2073
          %v2096 = vadd.f32 %v2095, %v2075
          %v2097 = vadd.f32 %v2096, %v2077
          %v2098 = vrot.slane %v2097, 4
          %v2099 = vadd.f32 %v2097, %v2098
          %v2100 = vrot.slane %v2099, 2
          %v2101 = vadd.f32 %v2099, %v2100
          %v2102 = vrot.slane %v2101, 1
          %v2103 = vadd.f32 %v2101, %v2102
          %v2106 = vcombine.low %v2090, %v2103
          %v2108 = vunpack.c.l.s4 1966171168
          %v2109 = vunpack.c.0.s8 %v2108
          %v2110 = vlaneseq
          %v2111 = vshrl.u32 %v2110, 7
          %v2112 = vsub.s32 %v2109, %v2111
          %v2113 = vrot.slane %v2106, %v2112
          %v2115 = vunpack.c.l.s4 1966171168
          %v2116 = vunpack.c.0.s8 %v2115
          %v2117 = vlaneseq
          %v2118 = vshrl.u32 %v2117, 7
          %v2119 = vsub.s32 %v2116, %v2118
          %v2120 = vrot.slane %v2113, %v2119
          %v2122 = vadd.f32 %v2061, %v2120
          %2123 = vst.msk [vmem:[%s2060] ss:$8 sm:$0x3] %vm2057, %v2122
          %2124 = vst.msk [vmem:[%s2060] ss:$8 sm:$0x0] %vm2057, %v2122
          %p2125 = scmp.eq.s32.totalorder %s24, 3
          // Predicated region
          $region61: #{tpu_custom_call.1} parent=55 // pred_check
            %p2126 = pneg %p2125
          $region62: #{tpu_custom_call.1} parent=55 // pred_check_branch
            %2128 = sbr.rel (%p2126) target = $region64
          $region63: #{tpu_custom_call.1} parent=55 // pred_region
            %s2129 = scalar_lea.vmem %s4, 2
            %v2130 = vld [vmem:[%s2129] ss:$8 sm:$0x3]
            %s2131 = scalar_lea.vmem %s4, 3
            %v2132 = vld [vmem:[%s2131] ss:$8 sm:$0x3]
            %v2133 = vld [vmem:[%s2007] ss:$8 sm:$0x3]
            %v2134 = vmul.f32 %v2133, 0.005
            %v2135 = vld [vmem:[%s2060] ss:$8 sm:$0x3]
            %v2136 = vmul.f32 %v2135, 0.005
            %v2137 = vmul.f32 %v2134, %v2134
            %v2138 = vsub.f32 %v2136, %v2137
            %v2139 = vmax.f32 %v2138, 0.0
            %v2140 = vadd.f32 %v2139, 1e-05
            %v2141 = vrsqrt.pop %v2140
            %v2142 = vmul.f32 %v2130, %v2141
            %s2143 = scalar_lea.vmem [#allocation4], 6
            %2144 = vst.msk [vmem:[%s2143] ss:$8 sm:$0x3] %vm2057, %v2142
            %2145 = vst.msk [vmem:[%s2143] ss:$8 sm:$0x0] %vm2057, %v2142
            %v2146 = vmul.f32 %v2134, %v2142
            %v2147 = vsub.f32 %v2132, %v2146
            %s2148 = scalar_lea.vmem [#allocation4], 7
            %2149 = vst.msk [vmem:[%s2148] ss:$8 sm:$0x3] %vm2057, %v2147
            %2150 = vst.msk [vmem:[%s2148] ss:$8 sm:$0x0] %vm2057, %v2147
          $region64: #{tpu_custom_call.1} parent=55 // pred_fallthru
            _
        $region56: #{tpu_custom_call.1} parent=39 // pred_fallthru
          _
        %p2151 = scmp.eq.s32.totalorder %s23, 2
        // Predicated region
        $region65: #{tpu_custom_call.1} parent=39 // pred_check
          %p2152 = pneg %p2151
        $region66: #{tpu_custom_call.1} parent=39 // pred_check_branch
          %2154 = sbr.rel (%p2152) target = $region68
        $region67: #{tpu_custom_call.1} parent=39 // pred_region
          %s2155 = scalar_lea.vmem [#allocation4], 6
          %v2156 = vld [vmem:[%s2155] ss:$8 sm:$0x3]
          %s2157 = scalar_lea.vmem [#allocation4], 7
          %v2158 = vld [vmem:[%s2157] ss:$8 sm:$0x3]
          %s2159 = smul.u32 %s24, 8
          %s2160 = smul.addr %s2159, 8
          %s2161 = scalar_lea.vmem [#allocation3], %s2160
          %v2162 = vld [vmem:[%s2161] sm:$0xff]
          %v2163 = vld [vmem:[%s2161 + $0x8] sm:$0xff]
          %v2164 = vld [vmem:[%s2161 + $0x10] sm:$0xff]
          %v2165 = vld [vmem:[%s2161 + $0x18] sm:$0xff]
          %v2166 = vld [vmem:[%s2161 + $0x20] sm:$0xff]
          %v2167 = vld [vmem:[%s2161 + $0x28] sm:$0xff]
          %v2168 = vld [vmem:[%s2161 + $0x30] sm:$0xff]
          %v2169 = vld [vmem:[%s2161 + $0x38] sm:$0xff]
          %v2170 = vunpack.c.l.bf16 %v2162
          %v2171 = vunpack.c.l.bf16 %v2163
          %v2172 = vunpack.c.h.bf16 %v2162
          %v2173 = vunpack.c.h.bf16 %v2163
          %v2174 = vunpack.c.l.bf16 %v2164
          %v2175 = vunpack.c.l.bf16 %v2165
          %v2176 = vunpack.c.h.bf16 %v2164
          %v2177 = vunpack.c.h.bf16 %v2165
          %v2178 = vunpack.c.l.bf16 %v2166
          %v2179 = vunpack.c.l.bf16 %v2167
          %v2180 = vunpack.c.h.bf16 %v2166
          %v2181 = vunpack.c.h.bf16 %v2167
          %v2182 = vunpack.c.l.bf16 %v2168
          %v2183 = vunpack.c.l.bf16 %v2169
          %v2184 = vunpack.c.h.bf16 %v2168
          %v2185 = vunpack.c.h.bf16 %v2169
          %v2187 = vlaneseq
          %v2188 = vshrl.u32 %v2187, 7
          %v2189 = vsub.s32 0, %v2188
          %v2190 = vrot.slane %v2156, %v2189
          %v2191 = vlaneseq
          %v2192 = vshrl.u32 %v2191, 7
          %v2193 = vsub.s32 1, %v2192
          %v2194 = vrot.slane %v2156, %v2193
          %v2197 = vmul.f32 %v2170, %v2190
          %v2198 = vmul.f32 %v2171, %v2194
          %v2199 = vmul.f32 %v2172, %v2190
          %v2200 = vmul.f32 %v2173, %v2194
          %v2201 = vmul.f32 %v2174, %v2190
          %v2202 = vmul.f32 %v2175, %v2194
          %v2203 = vmul.f32 %v2176, %v2190
          %v2204 = vmul.f32 %v2177, %v2194
          %v2205 = vmul.f32 %v2178, %v2190
          %v2206 = vmul.f32 %v2179, %v2194
          %v2207 = vmul.f32 %v2180, %v2190
          %v2208 = vmul.f32 %v2181, %v2194
          %v2209 = vmul.f32 %v2182, %v2190
          %v2210 = vmul.f32 %v2183, %v2194
          %v2211 = vmul.f32 %v2184, %v2190
          %v2212 = vmul.f32 %v2185, %v2194
          %v2214 = vlaneseq
          %v2215 = vshrl.u32 %v2214, 7
          %v2216 = vsub.s32 0, %v2215
          %v2217 = vrot.slane %v2158, %v2216
          %v2218 = vlaneseq
          %v2219 = vshrl.u32 %v2218, 7
          %v2220 = vsub.s32 1, %v2219
          %v2221 = vrot.slane %v2158, %v2220
          %v2224 = vadd.f32 %v2197, %v2217
          %v2225 = vadd.f32 %v2198, %v2221
          %v2226 = vadd.f32 %v2199, %v2217
          %v2227 = vadd.f32 %v2200, %v2221
          %v2228 = vadd.f32 %v2201, %v2217
          %v2229 = vadd.f32 %v2202, %v2221
          %v2230 = vadd.f32 %v2203, %v2217
          %v2231 = vadd.f32 %v2204, %v2221
          %v2232 = vadd.f32 %v2205, %v2217
          %v2233 = vadd.f32 %v2206, %v2221
          %v2234 = vadd.f32 %v2207, %v2217
          %v2235 = vadd.f32 %v2208, %v2221
          %v2236 = vadd.f32 %v2209, %v2217
          %v2237 = vadd.f32 %v2210, %v2221
          %v2238 = vadd.f32 %v2211, %v2217
          %v2239 = vadd.f32 %v2212, %v2221
          %v2240 = vmax.f32 %v2224, 0.0
          %v2241 = vmax.f32 %v2225, 0.0
          %v2242 = vmax.f32 %v2226, 0.0
          %v2243 = vmax.f32 %v2227, 0.0
          %v2244 = vmax.f32 %v2228, 0.0
          %v2245 = vmax.f32 %v2229, 0.0
          %v2246 = vmax.f32 %v2230, 0.0
          %v2247 = vmax.f32 %v2231, 0.0
          %v2248 = vmax.f32 %v2232, 0.0
          %v2249 = vmax.f32 %v2233, 0.0
          %v2250 = vmax.f32 %v2234, 0.0
          %v2251 = vmax.f32 %v2235, 0.0
          %v2252 = vmax.f32 %v2236, 0.0
          %v2253 = vmax.f32 %v2237, 0.0
          %v2254 = vmax.f32 %v2238, 0.0
          %v2255 = vmax.f32 %v2239, 0.0
          %v2256 = vld [vmem:[%s4 + $0x4] ss:$0 sm:$0xff]
          %v2257 = vpack.c.bf16 %v2242, %v2240
          %v2258 = vpack.c.bf16 %v2243, %v2241
          %v2259 = vpack.c.bf16 %v2246, %v2244
          %v2260 = vpack.c.bf16 %v2247, %v2245
          %v2261 = vpack.c.bf16 %v2250, %v2248
          %v2262 = vpack.c.bf16 %v2251, %v2249
          %v2263 = vpack.c.bf16 %v2254, %v2252
          %v2264 = vpack.c.bf16 %v2255, %v2253
          %v2265 = vld [vmem:[%s3] sm:$0xf]
          %v2266 = vld [vmem:[%s3 + $0x4] sm:$0xf]
          %v2267 = vld [vmem:[%s3 + $0x8] sm:$0xf]
          %v2268 = vld [vmem:[%s3 + $0xc] sm:$0xf]
          %v2269 = vld [vmem:[%s3 + $0x10] sm:$0xf]
          %v2270 = vld [vmem:[%s3 + $0x14] sm:$0xf]
          %v2271 = vld [vmem:[%s3 + $0x18] sm:$0xf]
          %v2272 = vld [vmem:[%s3 + $0x1c] sm:$0xf]
          %v2273 = vld [vmem:[%s3 + $0x20] sm:$0xf]
          %v2274 = vld [vmem:[%s3 + $0x24] sm:$0xf]
          %v2275 = vld [vmem:[%s3 + $0x28] sm:$0xf]
          %v2276 = vld [vmem:[%s3 + $0x2c] sm:$0xf]
          %v2277 = vld [vmem:[%s3 + $0x30] sm:$0xf]
          %v2278 = vld [vmem:[%s3 + $0x34] sm:$0xf]
          %v2279 = vld [vmem:[%s3 + $0x38] sm:$0xf]
          %v2280 = vld [vmem:[%s3 + $0x3c] sm:$0xf]
          %v2281 = vld [vmem:[%s3 + $0x40] sm:$0xf]
          %v2282 = vld [vmem:[%s3 + $0x44] sm:$0xf]
          %v2283 = vld [vmem:[%s3 + $0x48] sm:$0xf]
          %v2284 = vld [vmem:[%s3 + $0x4c] sm:$0xf]
          %v2285 = vld [vmem:[%s3 + $0x50] sm:$0xf]
          %v2286 = vld [vmem:[%s3 + $0x54] sm:$0xf]
          %v2287 = vld [vmem:[%s3 + $0x58] sm:$0xf]
          %v2288 = vld [vmem:[%s3 + $0x5c] sm:$0xf]
          %v2289 = vld [vmem:[%s3 + $0x60] sm:$0xf]
          %v2290 = vld [vmem:[%s3 + $0x64] sm:$0xf]
          %v2291 = vld [vmem:[%s3 + $0x68] sm:$0xf]
          %v2292 = vld [vmem:[%s3 + $0x6c] sm:$0xf]
          %v2293 = vld [vmem:[%s3 + $0x70] sm:$0xf]
          %v2294 = vld [vmem:[%s3 + $0x74] sm:$0xf]
          %v2295 = vld [vmem:[%s3 + $0x78] sm:$0xf]
          %v2296 = vld [vmem:[%s3 + $0x7c] sm:$0xf]
          %v2329 = vunpack.c.l.b16 %v2265
          %v2330 = vunpack.c.l.b16 %v2266
          %v2331 = vunpack.c.l.b16 %v2267
          %v2332 = vunpack.c.l.b16 %v2268
          %v2333 = vunpack.c.l.b16 %v2269
          %v2334 = vunpack.c.l.b16 %v2270
          %v2335 = vunpack.c.l.b16 %v2271
          %v2336 = vunpack.c.l.b16 %v2272
          %v2337 = vunpack.c.l.b16 %v2273
          %v2338 = vunpack.c.l.b16 %v2274
          %v2339 = vunpack.c.l.b16 %v2275
          %v2340 = vunpack.c.l.b16 %v2276
          %v2341 = vunpack.c.l.b16 %v2277
          %v2342 = vunpack.c.l.b16 %v2278
          %v2343 = vunpack.c.l.b16 %v2279
          %v2344 = vunpack.c.l.b16 %v2280
          %v2345 = vunpack.c.l.b16 %v2281
          %v2346 = vunpack.c.l.b16 %v2282
          %v2347 = vunpack.c.l.b16 %v2283
          %v2348 = vunpack.c.l.b16 %v2284
          %v2349 = vunpack.c.l.b16 %v2285
          %v2350 = vunpack.c.l.b16 %v2286
          %v2351 = vunpack.c.l.b16 %v2287
          %v2352 = vunpack.c.l.b16 %v2288
          %v2353 = vunpack.c.l.b16 %v2289
          %v2354 = vunpack.c.l.b16 %v2290
          %v2355 = vunpack.c.l.b16 %v2291
          %v2356 = vunpack.c.l.b16 %v2292
          %v2357 = vunpack.c.l.b16 %v2293
          %v2358 = vunpack.c.l.b16 %v2294
          %v2359 = vunpack.c.l.b16 %v2295
          %v2360 = vunpack.c.l.b16 %v2296
          %v2361 = vpack.c.b16 %v2330, %v2329
          %v2362 = vpack.c.b16 %v2332, %v2331
          %v2363 = vpack.c.b16 %v2334, %v2333
          %v2364 = vpack.c.b16 %v2336, %v2335
          %v2365 = vpack.c.b16 %v2338, %v2337
          %v2366 = vpack.c.b16 %v2340, %v2339
          %v2367 = vpack.c.b16 %v2342, %v2341
          %v2368 = vpack.c.b16 %v2344, %v2343
          %v2369 = vpack.c.b16 %v2346, %v2345
          %v2370 = vpack.c.b16 %v2348, %v2347
          %v2371 = vpack.c.b16 %v2350, %v2349
          %v2372 = vpack.c.b16 %v2352, %v2351
          %v2373 = vpack.c.b16 %v2354, %v2353
          %v2374 = vpack.c.b16 %v2356, %v2355
          %v2375 = vpack.c.b16 %v2358, %v2357
          %v2376 = vpack.c.b16 %v2360, %v2359
          %2393 = vmatprep.subr.bf16.mxu0 0
          %2394 = vmatpush1.bf16.msra.mxu0 %v2361
          %2395 = vmatprep.subr.bf16.mxu0 0
          %2396 = vmatpush1.bf16.msra.mxu0 %v2362
          %2397 = vmatprep.subr.bf16.mxu0 0
          %2398 = vmatpush1.bf16.msra.mxu0 %v2363
          %2399 = vmatprep.subr.bf16.mxu0 0
          %2400 = vmatpush1.bf16.msra.mxu0 %v2364
          %2401 = vmatprep.subr.bf16.mxu0 0
          %2402 = vmatpush1.bf16.msra.mxu0 %v2365
          %2403 = vmatprep.subr.bf16.mxu0 0
          %2404 = vmatpush1.bf16.msra.mxu0 %v2366
          %2405 = vmatprep.subr.bf16.mxu0 0
          %2406 = vmatpush1.bf16.msra.mxu0 %v2367
          %2407 = vmatprep.subr.bf16.mxu0 0
          %2408 = vmatpush1.bf16.msra.mxu0 %v2368
          %2409 = vmatprep.subr.bf16.mxu0 0
          %2410 = vmatpush1.bf16.msra.mxu0 %v2369
          %2411 = vmatprep.subr.bf16.mxu0 0
          %2412 = vmatpush1.bf16.msra.mxu0 %v2370
          %2413 = vmatprep.subr.bf16.mxu0 0
          %2414 = vmatpush1.bf16.msra.mxu0 %v2371
          %2415 = vmatprep.subr.bf16.mxu0 0
          %2416 = vmatpush1.bf16.msra.mxu0 %v2372
          %2417 = vmatprep.subr.bf16.mxu0 0
          %2418 = vmatpush1.bf16.msra.mxu0 %v2373
          %2419 = vmatprep.subr.bf16.mxu0 0
          %2420 = vmatpush1.bf16.msra.mxu0 %v2374
          %2421 = vmatprep.subr.bf16.mxu0 0
          %2422 = vmatpush1.bf16.msra.mxu0 %v2375
          %2423 = vmatprep.subr.bf16.mxu0 0
          %2424 = vmatpush1.bf16.msra.mxu0 %v2376
          %2425 = vmatprep.mubr.bf16.mxu0 %v2258
          %2426 = vmatmul.mubr.bf16.gmra.mrb[0].mxu0 %v2257
          %v2427 = vpop.f32.mrb[0].mxu0
          %v2428 = vadd.f32 %v2256, %v2427
          %v2429 = vpop.f32.mrb[0].mxu0
          %v2430 = vpop.f32.mrb[0].mxu0
          %v2431 = vadd.f32 %v2256, %v2430
          %v2432 = vpop.f32.mrb[0].mxu0
          %2433 = vmatprep.mubr.bf16.mxu0 %v2260
          %2434 = vmatmul.mubr.bf16.gmra.mrb[0].mxu0 %v2259
          %v2435 = vpop.f32.mrb[0].mxu0
          %v2436 = vadd.f32 %v2256, %v2435
          %v2437 = vpop.f32.mrb[0].mxu0
          %v2438 = vpop.f32.mrb[0].mxu0
          %v2439 = vadd.f32 %v2256, %v2438
          %v2440 = vpop.f32.mrb[0].mxu0
          %2441 = vmatprep.mubr.bf16.mxu0 %v2262
          %2442 = vmatmul.mubr.bf16.gmra.mrb[0].mxu0 %v2261
          %v2443 = vpop.f32.mrb[0].mxu0
          %v2444 = vadd.f32 %v2256, %v2443
          %v2445 = vpop.f32.mrb[0].mxu0
          %v2446 = vpop.f32.mrb[0].mxu0
          %v2447 = vadd.f32 %v2256, %v2446
          %v2448 = vpop.f32.mrb[0].mxu0
          %2449 = vmatprep.mubr.bf16.mxu0 %v2264
          %2450 = vmatmul.mubr.bf16.gmra.mrb[0].mxu0 %v2263
          %v2451 = vpop.f32.mrb[0].mxu0
          %v2452 = vadd.f32 %v2256, %v2451
          %v2453 = vpop.f32.mrb[0].mxu0
          %v2454 = vpop.f32.mrb[0].mxu0
          %v2455 = vadd.f32 %v2256, %v2454
          %v2456 = vpop.f32.mrb[0].mxu0
          %2457 = vdwg.mxu0
          %2458 = vst [vmem:[%s246] sm:$0xff] %v2428
          %2459 = vst [vmem:[%s246 + $0x8] sm:$0xff] %v2431
          %2460 = vst [vmem:[%s246 + $0x10] sm:$0xff] %v2436
          %2461 = vst [vmem:[%s246 + $0x18] sm:$0xff] %v2439
          %2462 = vst [vmem:[%s246 + $0x20] sm:$0xff] %v2444
          %2463 = vst [vmem:[%s246 + $0x28] sm:$0xff] %v2447
          %2464 = vst [vmem:[%s246 + $0x30] sm:$0xff] %v2452
          %2465 = vst [vmem:[%s246 + $0x38] sm:$0xff] %v2455
        $region68: #{tpu_custom_call.1} parent=39 // pred_fallthru
          _
        %s2466 = sand.u32 %s157, 1
        %s2467 = scalar_lea.sflag [#allocation6], %s2466
        %s2468 = sand.u32 %s157, 1
        %s2469 = smul.addr %s2468, 64
        %s2470 = scalar_lea.vmem [#allocation5], %s2469
        // Predicated region
        $region69: #{tpu_custom_call.1} parent=39 // pred_check
          %p2471 = pneg %p167
        $region70: #{tpu_custom_call.1} parent=39 // pred_check_branch
          %2473 = sbr.rel (%p2471) target = $region72
        $region71: #{tpu_custom_call.1} parent=39 // pred_region
          %p2474 = scmp.eq.s32.totalorder %s23, 2
          %s2475 = scalar_select %p2474, %s24, 0
          %s2476 = smul.u32 8, %s2475
          %s2478 = ssub.s32 1024, 1024
          %2479 = vsyncadd %s2467, %s2478
          %s2480 = smul.addr %s2476, 128
          %s2481 = scalar_lea.hbm %s5, %s2480
          %s2482 = sshll.u32 %s2470, 4
          %s2483 = int_to_ptr.vmem [resolvable:$true] %s2482
          %2488 = dma.vmem_to_hbm [thread:$0]  %s2483, 1024, %s2481, %s2467, 128, 128, 8
        $region72: #{tpu_custom_call.1} parent=39 // pred_fallthru
          _
      $region40: #{tpu_custom_call.1} parent=5 // pred_fallthru
        _
      %p2489 = scmp.le.s32.totalorder 2, %s14
      // Predicated region
      $region73: #{tpu_custom_call.1} parent=5 // pred_check
        %p2490 = pneg %p2489
      $region74: #{tpu_custom_call.1} parent=5 // pred_check_branch
        %2492 = sbr.rel (%p2490) target = $region76
      $region75: #{tpu_custom_call.1} parent=5 // pred_region
        %s2493 = ssub.s32 %s14, 2
        // Predicated region
        $region77: #{tpu_custom_call.1} parent=75 // pred_check
          %p2494 = pneg %p173
        $region78: #{tpu_custom_call.1} parent=75 // pred_check_branch
          %2496 = sbr.rel (%p2494) target = $region80
        $region79: #{tpu_custom_call.1} parent=75 // pred_region
          %s2497 = sand.u32 %s158, 1
          %s2498 = scalar_lea.sflag [#allocation6], %s2497
          %s2499 = sand.u32 %s158, 1
          %s2500 = smul.addr %s2499, 64
          %s2501 = scalar_lea.vmem [#allocation5], %s2500
          %2502 = dma.done %s2498, 1024
        $region80: #{tpu_custom_call.1} parent=75 // pred_fallthru
          _
      $region76: #{tpu_custom_call.1} parent=5 // pred_fallthru
        _
    $region6: #{tpu_custom_call.1} parent=1 // loop_footer
      %s18 = sadd.s32 1, %s14
    $region7: #{tpu_custom_call.1} parent=1 // loop_footer_branch
      %13 = sbr.rel target = $region3
    $region8: #{tpu_custom_call.1} parent=1 // loop_exit
      _
    %2503 = vsyncpa [#allocation6], 1
    %s2504 = scalar_lea.sflag [#allocation6], 1
    %2505 = vsyncpa %s2504, 1

</llo_original>
